<compile_context>
chip_gen: v7x
topology: tpu7x:2x2x1
jax: 0.10.0
libtpu: 0.0.40
codegen_flags: <defaults>
</compile_context>

<pallas_src>
import functools

import jax
import jax.numpy as jnp
from jax.experimental import pallas as pl
from jax.experimental.pallas import tpu as pltpu  # noqa: F401  (TPU backend)


# ---------------------------------------------------------------------------
# Fused kernel: bidirectional-GRU last step  +  Conv1d  +  Linear
# ---------------------------------------------------------------------------
def _fused_kernel(x_ref, wi_ref, whf_ref, b_ref, wconv_ref, bconv_ref,
                  wfc_ref, bfc_ref, y_ref, *, T, B, H, kernelsize, stride):
    f32 = jnp.float32
    dot = functools.partial(jnp.dot, preferred_element_type=f32)

    b = b_ref[...]                       # (4, 3H): [b_ih_f, b_hh_f, b_ih_b, b_hh_b]
    bi_f, bh_f, bi_b, bh_b = b[0:1], b[1:2], b[2:3], b[3:4]

    def gru_gates(gi, gh, h_prev):
        # PyTorch GRU cell (gi = W_i x + b_i, gh = W_h h + b_h, gate order r|z|n):
        #   r = sigmoid(gi_r + gh_r); z = sigmoid(gi_z + gh_z)
        #   n = tanh(gi_n + r * gh_n); h' = (1 - z) * n + z * h
        r = jax.nn.sigmoid(gi[:, :H] + gh[:, :H])
        z = jax.nn.sigmoid(gi[:, H:2 * H] + gh[:, H:2 * H])
        n = jnp.tanh(gi[:, 2 * H:] + r * gh[:, 2 * H:])
        return (1.0 - z) * n + z * h_prev

    # Hoisted (non-sequential) input projection for the forward direction:
    # one (T*B, I) x (I, 3H) matmul instead of T tiny per-step matmuls.
    xw_f = dot(x_ref[...], wi_ref[0]) + bi_f                    # (T*B, 3H)
    whf = whf_ref[...]                                          # (H, 3H)

    # Forward recurrence, fully unrolled (T is small and static).
    h = jnp.zeros((B, H), f32)
    for t in range(T):
        gh = dot(h, whf) + bh_f                                 # (B, 3H)
        h = gru_gates(xw_f[t * B:(t + 1) * B], gh, h)
    h_fwd = h

    # Backward direction: rnn_out[:, -1, H:] == one reverse-GRU step on x[T-1]
    # from h0 = 0, so W_hh_b @ h0 == 0 and only the biases remain on the h side.
    gi_b = dot(x_ref[(T - 1) * B:T * B, :], wi_ref[1]) + bi_b   # (B, 3H)
    h_bwd = gru_gates(gi_b, bh_b, jnp.zeros((B, H), f32))

    # nn.Dropout(0.2) is the identity at inference time.
    # TODO(synk): training-mode dropout (random mask + 1/(1-p) scaling) not implemented.
    feat = jnp.concatenate([h_fwd, h_bwd], axis=-1)             # (B, 2H) == rnn_out[:, -1]

    # Conv1d(B, B, kernelsize, stride) on unbatched (C=B, L=2H): tap matmuls on
    # the VMEM-resident feature tile (matches the PyTorch reference exactly).
    L_out = (2 * H - kernelsize) // stride + 1
    acc = jnp.zeros((B, L_out), f32)
    for tk in range(kernelsize):                                # static taps, unrolled
        sl = feat[:, tk: tk + stride * (L_out - 1) + 1: stride]  # (B, L_out)
        acc = acc + dot(wconv_ref[tk], sl)
    conv = acc + bconv_ref[...]                                 # + conv bias (B, 1)

    # Final Linear(L_out, output_size).
    y_ref[...] = dot(conv, wfc_ref[...]) + bfc_ref[...]


# ---------------------------------------------------------------------------
# Wrapper (parameter re-layout is one-time glue; all hot math is in the kernel)
# ---------------------------------------------------------------------------
def transphere_gru_cnn_forward(x, params, *, kernelsize=4, stride=1):
    B, T, I = x.shape
    H = params["w_ih_f"].shape[0] // 3
    out_size = params["w_fc"].shape[0]
    f32 = jnp.float32

    # Time-major row blocks: row t*B + b  <->  x[b, t, :]
    x2d = jnp.transpose(x, (1, 0, 2)).reshape(T * B, I).astype(f32)      # (T*B, I)
    wi = jnp.stack([params["w_ih_f"].T, params["w_ih_b"].T]).astype(f32)  # (2, I, 3H)
    whf = params["w_hh_f"].T.astype(f32)                                  # (H, 3H)
    biases = jnp.stack([params["b_ih_f"], params["b_hh_f"],
                        params["b_ih_b"], params["b_hh_b"]]).astype(f32)  # (4, 3H)
    wconv_k = jnp.transpose(params["w_conv"], (2, 0, 1)).astype(f32)      # (k, B, B)
    bconv = params["b_conv"].reshape(B, 1).astype(f32)
    wfcT = params["w_fc"].T.astype(f32)                                   # (L_out, out)
    bfc = params["b_fc"].reshape(1, out_size).astype(f32)

    kernel = functools.partial(_fused_kernel, T=T, B=B, H=H,
                               kernelsize=kernelsize, stride=stride)

    # Whole working set is a few tens of KiB -> single invocation, no grid,
    # whole arrays resident in VMEM (no per-step pipeline bookkeeping).
    return pl.pallas_call(
        kernel,
        out_shape=jax.ShapeDtypeStruct((B, out_size), f32),
    )(x2d, wi, whf, biases, wconv_k, bconv, wfcT, bfc)


# ---------------------------------------------------------------------------
# Pure-JAX reference (mirrors the PyTorch forward in eval mode)
# ---------------------------------------------------------------------------
def reference_forward(x, params, *, kernelsize=4, stride=1):
    B, T, I = x.shape
    H = params["w_ih_f"].shape[0] // 3

    def cell(x_t, h, w_ih, w_hh, b_ih, b_hh):
        gi = x_t @ w_ih.T + b_ih
        gh = h @ w_hh.T + b_hh
        i_r, i_z, i_n = jnp.split(gi, 3, axis=-1)
        h_r, h_z, h_n = jnp.split(gh, 3, axis=-1)
        r = jax.nn.sigmoid(i_r + h_r)
        z = jax.nn.sigmoid(i_z + h_z)
        n = jnp.tanh(i_n + r * h_n)
        return (1 - z) * n + z * h

    h = jnp.zeros((B, H), jnp.float32)
    for t in range(T):
        h = cell(x[:, t], h, params["w_ih_f"], params["w_hh_f"],
                 params["b_ih_f"], params["b_hh_f"])
    h_fwd = h
    h = jnp.zeros((B, H), jnp.float32)
    h_bwd_at_last = None
    for t in range(T - 1, -1, -1):
        h = cell(x[:, t], h, params["w_ih_b"], params["w_hh_b"],
                 params["b_ih_b"], params["b_hh_b"])
        if t == T - 1:
            h_bwd_at_last = h
    feat = jnp.concatenate([h_fwd, h_bwd_at_last], axis=-1)       # rnn_out[:, -1]

    L = 2 * H
    L_out = (L - kernelsize) // stride + 1
    conv = params["b_conv"][:, None] + sum(
        params["w_conv"][:, :, t] @ feat[:, t: t + stride * (L_out - 1) + 1: stride]
        for t in range(kernelsize))
    return conv @ params["w_fc"].T + params["b_fc"][None, :]


# ---------------------------------------------------------------------------
# Deterministic parameter init (shapes follow the module's __init__)
# ---------------------------------------------------------------------------
def init_params(key, *, input_size, hidden, batch, kernelsize, output_size, stride=1):
    ks = jax.random.split(key, 12)
    u = lambda k, shape, b: jax.random.uniform(k, shape, jnp.float32, -b, b)
    bnd = hidden ** -0.5
    p = dict(
        w_ih_f=u(ks[0], (3 * hidden, input_size), bnd),
        w_hh_f=u(ks[1], (3 * hidden, hidden), bnd),
        b_ih_f=u(ks[2], (3 * hidden,), bnd),
        b_hh_f=u(ks[3], (3 * hidden,), bnd),
        w_ih_b=u(ks[4], (3 * hidden, input_size), bnd),
        w_hh_b=u(ks[5], (3 * hidden, hidden), bnd),
        b_ih_b=u(ks[6], (3 * hidden,), bnd),
        b_hh_b=u(ks[7], (3 * hidden,), bnd),
    )
    bnd_c = (batch * kernelsize) ** -0.5
    p["w_conv"] = u(ks[8], (batch, batch, kernelsize), bnd_c)     # Conv1d(B, B, k)
    p["b_conv"] = u(ks[9], (batch,), bnd_c)
    L_out = (2 * hidden - kernelsize) // stride + 1
    bnd_f = L_out ** -0.5
    p["w_fc"] = u(ks[10], (output_size, L_out), bnd_f)            # Linear(L_out, out)
    p["b_fc"] = u(ks[11], (output_size,), bnd_f)
    return p


if __name__ == "__main__":
    B, T, I, H = 4, 8, 16, 32        # BATCH_SIZE, seq len, input size, GRU hidden
    KS, STRIDE, OUT = 4, 1, 5        # kernelsize, stride, output_size

    key = jax.random.PRNGKey(0)
    kx, kp = jax.random.split(key)
    x = jax.random.normal(kx, (B, T, I), jnp.float32)
    params = init_params(kp, input_size=I, hidden=H, batch=B,
                         kernelsize=KS, output_size=OUT, stride=STRIDE)

    y = transphere_gru_cnn_forward(x, params, kernelsize=KS, stride=STRIDE)
    y = jax.block_until_ready(y)

    y_ref = reference_forward(x, params, kernelsize=KS, stride=STRIDE)
    assert y.shape == (B, OUT), y.shape
    max_err = float(jnp.max(jnp.abs(y - y_ref)))
    assert jnp.allclose(y, y_ref, rtol=2e-3, atol=2e-3), max_err
    print("KERNEL_OK")
</pallas_src>

<mosaic_0001>
module attributes {stable_mosaic.version = 11 : i64} {
  func.func @_fused_kernel(%arg0: memref<32x16xf32, #tpu.memory_space<vmem>>, %arg1: memref<2x16x96xf32, #tpu.memory_space<vmem>>, %arg2: memref<32x96xf32, #tpu.memory_space<vmem>>, %arg3: memref<4x96xf32, #tpu.memory_space<vmem>>, %arg4: memref<4x4x4xf32, #tpu.memory_space<vmem>>, %arg5: memref<4x1xf32, #tpu.memory_space<vmem>>, %arg6: memref<61x5xf32, #tpu.memory_space<vmem>>, %arg7: memref<1x5xf32, #tpu.memory_space<vmem>>, %arg8: memref<4x5xf32, #tpu.memory_space<vmem>>) attributes {dimension_semantics = [], scalar_prefetch = 0 : i64, scratch_operands = 0 : i64, tpu.core_type = #tpu.core_type<tc>} {
    %c0 = arith.constant 0 : index
    %c0_0 = arith.constant 0 : index
    %0 = vector.load %arg3[%c0, %c0_0] : memref<4x96xf32, #tpu.memory_space<vmem>>, vector<4x96xf32>
    %1 = vector.extract_strided_slice %0 {offsets = [0, 0], sizes = [1, 96], strides = [1, 1]} : vector<4x96xf32> to vector<1x96xf32>
    %2 = vector.extract_strided_slice %0 {offsets = [1, 0], sizes = [1, 96], strides = [1, 1]} : vector<4x96xf32> to vector<1x96xf32>
    %3 = vector.extract_strided_slice %0 {offsets = [2, 0], sizes = [1, 96], strides = [1, 1]} : vector<4x96xf32> to vector<1x96xf32>
    %4 = vector.extract_strided_slice %0 {offsets = [3, 0], sizes = [1, 96], strides = [1, 1]} : vector<4x96xf32> to vector<1x96xf32>
    %c0_1 = arith.constant 0 : index
    %c0_2 = arith.constant 0 : index
    %5 = vector.load %arg0[%c0_1, %c0_2] : memref<32x16xf32, #tpu.memory_space<vmem>>, vector<32x16xf32>
    %c0_3 = arith.constant 0 : index
    %c0_4 = arith.constant 0 : index
    %c0_5 = arith.constant 0 : index
    %6 = vector.load %arg1[%c0_3, %c0_4, %c0_5] : memref<2x16x96xf32, #tpu.memory_space<vmem>>, vector<1x16x96xf32>
    %7 = vector.shape_cast %6 : vector<1x16x96xf32> to vector<16x96xf32>
    %cst = arith.constant dense<0.000000e+00> : vector<32x96xf32>
    %8 = tpu.matmul %5, %7, %cst {dimension_numbers = #tpu.dot_dimension_numbers<[1], [0], [0], [1], [0, 0, 1, 1], [], []>} : vector<32x16xf32>, vector<16x96xf32>, vector<32x96xf32> -> vector<32x96xf32>
    %9 = vector.broadcast %1 : vector<1x96xf32> to vector<32x96xf32>
    %10 = arith.addf %8, %9 : vector<32x96xf32>
    %c0_6 = arith.constant 0 : index
    %c0_7 = arith.constant 0 : index
    %11 = vector.load %arg2[%c0_6, %c0_7] : memref<32x96xf32, #tpu.memory_space<vmem>>, vector<32x96xf32>
    %cst_8 = arith.constant 0.000000e+00 : f32
    %12 = vector.broadcast %cst_8 : f32 to vector<4x32xf32>
    %cst_9 = arith.constant dense<0.000000e+00> : vector<4x96xf32>
    %13 = tpu.matmul %12, %11, %cst_9 {dimension_numbers = #tpu.dot_dimension_numbers<[1], [0], [0], [1], [0, 0, 1, 1], [], []>} : vector<4x32xf32>, vector<32x96xf32>, vector<4x96xf32> -> vector<4x96xf32>
    %14 = vector.broadcast %2 : vector<1x96xf32> to vector<4x96xf32>
    %15 = arith.addf %13, %14 : vector<4x96xf32>
    %16 = vector.extract_strided_slice %10 {offsets = [0, 0], sizes = [4, 96], strides = [1, 1]} : vector<32x96xf32> to vector<4x96xf32>
    %17 = vector.extract_strided_slice %16 {offsets = [0, 0], sizes = [4, 32], strides = [1, 1]} : vector<4x96xf32> to vector<4x32xf32>
    %18 = vector.extract_strided_slice %15 {offsets = [0, 0], sizes = [4, 32], strides = [1, 1]} : vector<4x96xf32> to vector<4x32xf32>
    %19 = arith.addf %17, %18 : vector<4x32xf32>
    %20 = arith.negf %19 : vector<4x32xf32>
    %21 = math.exp %20 : vector<4x32xf32>
    %cst_10 = arith.constant 1.000000e+00 : f32
    %22 = vector.broadcast %cst_10 : f32 to vector<4x32xf32>
    %23 = arith.addf %22, %21 : vector<4x32xf32>
    %24 = arith.divf %22, %23 : vector<4x32xf32>
    %25 = vector.extract_strided_slice %16 {offsets = [0, 32], sizes = [4, 32], strides = [1, 1]} : vector<4x96xf32> to vector<4x32xf32>
    %26 = vector.extract_strided_slice %15 {offsets = [0, 32], sizes = [4, 32], strides = [1, 1]} : vector<4x96xf32> to vector<4x32xf32>
    %27 = arith.addf %25, %26 : vector<4x32xf32>
    %28 = arith.negf %27 : vector<4x32xf32>
    %29 = math.exp %28 : vector<4x32xf32>
    %cst_11 = arith.constant 1.000000e+00 : f32
    %30 = vector.broadcast %cst_11 : f32 to vector<4x32xf32>
    %31 = arith.addf %30, %29 : vector<4x32xf32>
    %32 = arith.divf %30, %31 : vector<4x32xf32>
    %33 = vector.extract_strided_slice %16 {offsets = [0, 64], sizes = [4, 32], strides = [1, 1]} : vector<4x96xf32> to vector<4x32xf32>
    %34 = vector.extract_strided_slice %15 {offsets = [0, 64], sizes = [4, 32], strides = [1, 1]} : vector<4x96xf32> to vector<4x32xf32>
    %35 = arith.mulf %24, %34 : vector<4x32xf32>
    %36 = arith.addf %33, %35 : vector<4x32xf32>
    %37 = math.tanh %36 : vector<4x32xf32>
    %cst_12 = arith.constant 1.000000e+00 : f32
    %38 = vector.broadcast %cst_12 : f32 to vector<4x32xf32>
    %39 = arith.subf %38, %32 : vector<4x32xf32>
    %40 = arith.mulf %39, %37 : vector<4x32xf32>
    %41 = arith.mulf %32, %12 : vector<4x32xf32>
    %42 = arith.addf %40, %41 : vector<4x32xf32>
    %cst_13 = arith.constant dense<0.000000e+00> : vector<4x96xf32>
    %43 = tpu.matmul %42, %11, %cst_13 {dimension_numbers = #tpu.dot_dimension_numbers<[1], [0], [0], [1], [0, 0, 1, 1], [], []>} : vector<4x32xf32>, vector<32x96xf32>, vector<4x96xf32> -> vector<4x96xf32>
    %44 = vector.broadcast %2 : vector<1x96xf32> to vector<4x96xf32>
    %45 = arith.addf %43, %44 : vector<4x96xf32>
    %46 = vector.extract_strided_slice %10 {offsets = [4, 0], sizes = [4, 96], strides = [1, 1]} : vector<32x96xf32> to vector<4x96xf32>
    %47 = vector.extract_strided_slice %46 {offsets = [0, 0], sizes = [4, 32], strides = [1, 1]} : vector<4x96xf32> to vector<4x32xf32>
    %48 = vector.extract_strided_slice %45 {offsets = [0, 0], sizes = [4, 32], strides = [1, 1]} : vector<4x96xf32> to vector<4x32xf32>
    %49 = arith.addf %47, %48 : vector<4x32xf32>
    %50 = arith.negf %49 : vector<4x32xf32>
    %51 = math.exp %50 : vector<4x32xf32>
    %cst_14 = arith.constant 1.000000e+00 : f32
    %52 = vector.broadcast %cst_14 : f32 to vector<4x32xf32>
    %53 = arith.addf %52, %51 : vector<4x32xf32>
    %54 = arith.divf %52, %53 : vector<4x32xf32>
    %55 = vector.extract_strided_slice %46 {offsets = [0, 32], sizes = [4, 32], strides = [1, 1]} : vector<4x96xf32> to vector<4x32xf32>
    %56 = vector.extract_strided_slice %45 {offsets = [0, 32], sizes = [4, 32], strides = [1, 1]} : vector<4x96xf32> to vector<4x32xf32>
    %57 = arith.addf %55, %56 : vector<4x32xf32>
    %58 = arith.negf %57 : vector<4x32xf32>
    %59 = math.exp %58 : vector<4x32xf32>
    %cst_15 = arith.constant 1.000000e+00 : f32
    %60 = vector.broadcast %cst_15 : f32 to vector<4x32xf32>
    %61 = arith.addf %60, %59 : vector<4x32xf32>
    %62 = arith.divf %60, %61 : vector<4x32xf32>
    %63 = vector.extract_strided_slice %46 {offsets = [0, 64], sizes = [4, 32], strides = [1, 1]} : vector<4x96xf32> to vector<4x32xf32>
    %64 = vector.extract_strided_slice %45 {offsets = [0, 64], sizes = [4, 32], strides = [1, 1]} : vector<4x96xf32> to vector<4x32xf32>
    %65 = arith.mulf %54, %64 : vector<4x32xf32>
    %66 = arith.addf %63, %65 : vector<4x32xf32>
    %67 = math.tanh %66 : vector<4x32xf32>
    %cst_16 = arith.constant 1.000000e+00 : f32
    %68 = vector.broadcast %cst_16 : f32 to vector<4x32xf32>
    %69 = arith.subf %68, %62 : vector<4x32xf32>
    %70 = arith.mulf %69, %67 : vector<4x32xf32>
    %71 = arith.mulf %62, %42 : vector<4x32xf32>
    %72 = arith.addf %70, %71 : vector<4x32xf32>
    %cst_17 = arith.constant dense<0.000000e+00> : vector<4x96xf32>
    %73 = tpu.matmul %72, %11, %cst_17 {dimension_numbers = #tpu.dot_dimension_numbers<[1], [0], [0], [1], [0, 0, 1, 1], [], []>} : vector<4x32xf32>, vector<32x96xf32>, vector<4x96xf32> -> vector<4x96xf32>
    %74 = vector.broadcast %2 : vector<1x96xf32> to vector<4x96xf32>
    %75 = arith.addf %73, %74 : vector<4x96xf32>
    %76 = vector.extract_strided_slice %10 {offsets = [8, 0], sizes = [4, 96], strides = [1, 1]} : vector<32x96xf32> to vector<4x96xf32>
    %77 = vector.extract_strided_slice %76 {offsets = [0, 0], sizes = [4, 32], strides = [1, 1]} : vector<4x96xf32> to vector<4x32xf32>
    %78 = vector.extract_strided_slice %75 {offsets = [0, 0], sizes = [4, 32], strides = [1, 1]} : vector<4x96xf32> to vector<4x32xf32>
    %79 = arith.addf %77, %78 : vector<4x32xf32>
    %80 = arith.negf %79 : vector<4x32xf32>
    %81 = math.exp %80 : vector<4x32xf32>
    %cst_18 = arith.constant 1.000000e+00 : f32
    %82 = vector.broadcast %cst_18 : f32 to vector<4x32xf32>
    %83 = arith.addf %82, %81 : vector<4x32xf32>
    %84 = arith.divf %82, %83 : vector<4x32xf32>
    %85 = vector.extract_strided_slice %76 {offsets = [0, 32], sizes = [4, 32], strides = [1, 1]} : vector<4x96xf32> to vector<4x32xf32>
    %86 = vector.extract_strided_slice %75 {offsets = [0, 32], sizes = [4, 32], strides = [1, 1]} : vector<4x96xf32> to vector<4x32xf32>
    %87 = arith.addf %85, %86 : vector<4x32xf32>
    %88 = arith.negf %87 : vector<4x32xf32>
    %89 = math.exp %88 : vector<4x32xf32>
    %cst_19 = arith.constant 1.000000e+00 : f32
    %90 = vector.broadcast %cst_19 : f32 to vector<4x32xf32>
    %91 = arith.addf %90, %89 : vector<4x32xf32>
    %92 = arith.divf %90, %91 : vector<4x32xf32>
    %93 = vector.extract_strided_slice %76 {offsets = [0, 64], sizes = [4, 32], strides = [1, 1]} : vector<4x96xf32> to vector<4x32xf32>
    %94 = vector.extract_strided_slice %75 {offsets = [0, 64], sizes = [4, 32], strides = [1, 1]} : vector<4x96xf32> to vector<4x32xf32>
    %95 = arith.mulf %84, %94 : vector<4x32xf32>
    %96 = arith.addf %93, %95 : vector<4x32xf32>
    %97 = math.tanh %96 : vector<4x32xf32>
    %cst_20 = arith.constant 1.000000e+00 : f32
    %98 = vector.broadcast %cst_20 : f32 to vector<4x32xf32>
    %99 = arith.subf %98, %92 : vector<4x32xf32>
    %100 = arith.mulf %99, %97 : vector<4x32xf32>
    %101 = arith.mulf %92, %72 : vector<4x32xf32>
    %102 = arith.addf %100, %101 : vector<4x32xf32>
    %cst_21 = arith.constant dense<0.000000e+00> : vector<4x96xf32>
    %103 = tpu.matmul %102, %11, %cst_21 {dimension_numbers = #tpu.dot_dimension_numbers<[1], [0], [0], [1], [0, 0, 1, 1], [], []>} : vector<4x32xf32>, vector<32x96xf32>, vector<4x96xf32> -> vector<4x96xf32>
    %104 = vector.broadcast %2 : vector<1x96xf32> to vector<4x96xf32>
    %105 = arith.addf %103, %104 : vector<4x96xf32>
    %106 = vector.extract_strided_slice %10 {offsets = [12, 0], sizes = [4, 96], strides = [1, 1]} : vector<32x96xf32> to vector<4x96xf32>
    %107 = vector.extract_strided_slice %106 {offsets = [0, 0], sizes = [4, 32], strides = [1, 1]} : vector<4x96xf32> to vector<4x32xf32>
    %108 = vector.extract_strided_slice %105 {offsets = [0, 0], sizes = [4, 32], strides = [1, 1]} : vector<4x96xf32> to vector<4x32xf32>
    %109 = arith.addf %107, %108 : vector<4x32xf32>
    %110 = arith.negf %109 : vector<4x32xf32>
    %111 = math.exp %110 : vector<4x32xf32>
    %cst_22 = arith.constant 1.000000e+00 : f32
    %112 = vector.broadcast %cst_22 : f32 to vector<4x32xf32>
    %113 = arith.addf %112, %111 : vector<4x32xf32>
    %114 = arith.divf %112, %113 : vector<4x32xf32>
    %115 = vector.extract_strided_slice %106 {offsets = [0, 32], sizes = [4, 32], strides = [1, 1]} : vector<4x96xf32> to vector<4x32xf32>
    %116 = vector.extract_strided_slice %105 {offsets = [0, 32], sizes = [4, 32], strides = [1, 1]} : vector<4x96xf32> to vector<4x32xf32>
    %117 = arith.addf %115, %116 : vector<4x32xf32>
    %118 = arith.negf %117 : vector<4x32xf32>
    %119 = math.exp %118 : vector<4x32xf32>
    %cst_23 = arith.constant 1.000000e+00 : f32
    %120 = vector.broadcast %cst_23 : f32 to vector<4x32xf32>
    %121 = arith.addf %120, %119 : vector<4x32xf32>
    %122 = arith.divf %120, %121 : vector<4x32xf32>
    %123 = vector.extract_strided_slice %106 {offsets = [0, 64], sizes = [4, 32], strides = [1, 1]} : vector<4x96xf32> to vector<4x32xf32>
    %124 = vector.extract_strided_slice %105 {offsets = [0, 64], sizes = [4, 32], strides = [1, 1]} : vector<4x96xf32> to vector<4x32xf32>
    %125 = arith.mulf %114, %124 : vector<4x32xf32>
    %126 = arith.addf %123, %125 : vector<4x32xf32>
    %127 = math.tanh %126 : vector<4x32xf32>
    %cst_24 = arith.constant 1.000000e+00 : f32
    %128 = vector.broadcast %cst_24 : f32 to vector<4x32xf32>
    %129 = arith.subf %128, %122 : vector<4x32xf32>
    %130 = arith.mulf %129, %127 : vector<4x32xf32>
    %131 = arith.mulf %122, %102 : vector<4x32xf32>
    %132 = arith.addf %130, %131 : vector<4x32xf32>
    %cst_25 = arith.constant dense<0.000000e+00> : vector<4x96xf32>
    %133 = tpu.matmul %132, %11, %cst_25 {dimension_numbers = #tpu.dot_dimension_numbers<[1], [0], [0], [1], [0, 0, 1, 1], [], []>} : vector<4x32xf32>, vector<32x96xf32>, vector<4x96xf32> -> vector<4x96xf32>
    %134 = vector.broadcast %2 : vector<1x96xf32> to vector<4x96xf32>
    %135 = arith.addf %133, %134 : vector<4x96xf32>
    %136 = vector.extract_strided_slice %10 {offsets = [16, 0], sizes = [4, 96], strides = [1, 1]} : vector<32x96xf32> to vector<4x96xf32>
    %137 = vector.extract_strided_slice %136 {offsets = [0, 0], sizes = [4, 32], strides = [1, 1]} : vector<4x96xf32> to vector<4x32xf32>
    %138 = vector.extract_strided_slice %135 {offsets = [0, 0], sizes = [4, 32], strides = [1, 1]} : vector<4x96xf32> to vector<4x32xf32>
    %139 = arith.addf %137, %138 : vector<4x32xf32>
    %140 = arith.negf %139 : vector<4x32xf32>
    %141 = math.exp %140 : vector<4x32xf32>
    %cst_26 = arith.constant 1.000000e+00 : f32
    %142 = vector.broadcast %cst_26 : f32 to vector<4x32xf32>
    %143 = arith.addf %142, %141 : vector<4x32xf32>
    %144 = arith.divf %142, %143 : vector<4x32xf32>
    %145 = vector.extract_strided_slice %136 {offsets = [0, 32], sizes = [4, 32], strides = [1, 1]} : vector<4x96xf32> to vector<4x32xf32>
    %146 = vector.extract_strided_slice %135 {offsets = [0, 32], sizes = [4, 32], strides = [1, 1]} : vector<4x96xf32> to vector<4x32xf32>
    %147 = arith.addf %145, %146 : vector<4x32xf32>
    %148 = arith.negf %147 : vector<4x32xf32>
    %149 = math.exp %148 : vector<4x32xf32>
    %cst_27 = arith.constant 1.000000e+00 : f32
    %150 = vector.broadcast %cst_27 : f32 to vector<4x32xf32>
    %151 = arith.addf %150, %149 : vector<4x32xf32>
    %152 = arith.divf %150, %151 : vector<4x32xf32>
    %153 = vector.extract_strided_slice %136 {offsets = [0, 64], sizes = [4, 32], strides = [1, 1]} : vector<4x96xf32> to vector<4x32xf32>
    %154 = vector.extract_strided_slice %135 {offsets = [0, 64], sizes = [4, 32], strides = [1, 1]} : vector<4x96xf32> to vector<4x32xf32>
    %155 = arith.mulf %144, %154 : vector<4x32xf32>
    %156 = arith.addf %153, %155 : vector<4x32xf32>
    %157 = math.tanh %156 : vector<4x32xf32>
    %cst_28 = arith.constant 1.000000e+00 : f32
    %158 = vector.broadcast %cst_28 : f32 to vector<4x32xf32>
    %159 = arith.subf %158, %152 : vector<4x32xf32>
    %160 = arith.mulf %159, %157 : vector<4x32xf32>
    %161 = arith.mulf %152, %132 : vector<4x32xf32>
    %162 = arith.addf %160, %161 : vector<4x32xf32>
    %cst_29 = arith.constant dense<0.000000e+00> : vector<4x96xf32>
    %163 = tpu.matmul %162, %11, %cst_29 {dimension_numbers = #tpu.dot_dimension_numbers<[1], [0], [0], [1], [0, 0, 1, 1], [], []>} : vector<4x32xf32>, vector<32x96xf32>, vector<4x96xf32> -> vector<4x96xf32>
    %164 = vector.broadcast %2 : vector<1x96xf32> to vector<4x96xf32>
    %165 = arith.addf %163, %164 : vector<4x96xf32>
    %166 = vector.extract_strided_slice %10 {offsets = [20, 0], sizes = [4, 96], strides = [1, 1]} : vector<32x96xf32> to vector<4x96xf32>
    %167 = vector.extract_strided_slice %166 {offsets = [0, 0], sizes = [4, 32], strides = [1, 1]} : vector<4x96xf32> to vector<4x32xf32>
    %168 = vector.extract_strided_slice %165 {offsets = [0, 0], sizes = [4, 32], strides = [1, 1]} : vector<4x96xf32> to vector<4x32xf32>
    %169 = arith.addf %167, %168 : vector<4x32xf32>
    %170 = arith.negf %169 : vector<4x32xf32>
    %171 = math.exp %170 : vector<4x32xf32>
    %cst_30 = arith.constant 1.000000e+00 : f32
    %172 = vector.broadcast %cst_30 : f32 to vector<4x32xf32>
    %173 = arith.addf %172, %171 : vector<4x32xf32>
    %174 = arith.divf %172, %173 : vector<4x32xf32>
    %175 = vector.extract_strided_slice %166 {offsets = [0, 32], sizes = [4, 32], strides = [1, 1]} : vector<4x96xf32> to vector<4x32xf32>
    %176 = vector.extract_strided_slice %165 {offsets = [0, 32], sizes = [4, 32], strides = [1, 1]} : vector<4x96xf32> to vector<4x32xf32>
    %177 = arith.addf %175, %176 : vector<4x32xf32>
    %178 = arith.negf %177 : vector<4x32xf32>
    %179 = math.exp %178 : vector<4x32xf32>
    %cst_31 = arith.constant 1.000000e+00 : f32
    %180 = vector.broadcast %cst_31 : f32 to vector<4x32xf32>
    %181 = arith.addf %180, %179 : vector<4x32xf32>
    %182 = arith.divf %180, %181 : vector<4x32xf32>
    %183 = vector.extract_strided_slice %166 {offsets = [0, 64], sizes = [4, 32], strides = [1, 1]} : vector<4x96xf32> to vector<4x32xf32>
    %184 = vector.extract_strided_slice %165 {offsets = [0, 64], sizes = [4, 32], strides = [1, 1]} : vector<4x96xf32> to vector<4x32xf32>
    %185 = arith.mulf %174, %184 : vector<4x32xf32>
    %186 = arith.addf %183, %185 : vector<4x32xf32>
    %187 = math.tanh %186 : vector<4x32xf32>
    %cst_32 = arith.constant 1.000000e+00 : f32
    %188 = vector.broadcast %cst_32 : f32 to vector<4x32xf32>
    %189 = arith.subf %188, %182 : vector<4x32xf32>
    %190 = arith.mulf %189, %187 : vector<4x32xf32>
    %191 = arith.mulf %182, %162 : vector<4x32xf32>
    %192 = arith.addf %190, %191 : vector<4x32xf32>
    %cst_33 = arith.constant dense<0.000000e+00> : vector<4x96xf32>
    %193 = tpu.matmul %192, %11, %cst_33 {dimension_numbers = #tpu.dot_dimension_numbers<[1], [0], [0], [1], [0, 0, 1, 1], [], []>} : vector<4x32xf32>, vector<32x96xf32>, vector<4x96xf32> -> vector<4x96xf32>
    %194 = vector.broadcast %2 : vector<1x96xf32> to vector<4x96xf32>
    %195 = arith.addf %193, %194 : vector<4x96xf32>
    %196 = vector.extract_strided_slice %10 {offsets = [24, 0], sizes = [4, 96], strides = [1, 1]} : vector<32x96xf32> to vector<4x96xf32>
    %197 = vector.extract_strided_slice %196 {offsets = [0, 0], sizes = [4, 32], strides = [1, 1]} : vector<4x96xf32> to vector<4x32xf32>
    %198 = vector.extract_strided_slice %195 {offsets = [0, 0], sizes = [4, 32], strides = [1, 1]} : vector<4x96xf32> to vector<4x32xf32>
    %199 = arith.addf %197, %198 : vector<4x32xf32>
    %200 = arith.negf %199 : vector<4x32xf32>
    %201 = math.exp %200 : vector<4x32xf32>
    %cst_34 = arith.constant 1.000000e+00 : f32
    %202 = vector.broadcast %cst_34 : f32 to vector<4x32xf32>
    %203 = arith.addf %202, %201 : vector<4x32xf32>
    %204 = arith.divf %202, %203 : vector<4x32xf32>
    %205 = vector.extract_strided_slice %196 {offsets = [0, 32], sizes = [4, 32], strides = [1, 1]} : vector<4x96xf32> to vector<4x32xf32>
    %206 = vector.extract_strided_slice %195 {offsets = [0, 32], sizes = [4, 32], strides = [1, 1]} : vector<4x96xf32> to vector<4x32xf32>
    %207 = arith.addf %205, %206 : vector<4x32xf32>
    %208 = arith.negf %207 : vector<4x32xf32>
    %209 = math.exp %208 : vector<4x32xf32>
    %cst_35 = arith.constant 1.000000e+00 : f32
    %210 = vector.broadcast %cst_35 : f32 to vector<4x32xf32>
    %211 = arith.addf %210, %209 : vector<4x32xf32>
    %212 = arith.divf %210, %211 : vector<4x32xf32>
    %213 = vector.extract_strided_slice %196 {offsets = [0, 64], sizes = [4, 32], strides = [1, 1]} : vector<4x96xf32> to vector<4x32xf32>
    %214 = vector.extract_strided_slice %195 {offsets = [0, 64], sizes = [4, 32], strides = [1, 1]} : vector<4x96xf32> to vector<4x32xf32>
    %215 = arith.mulf %204, %214 : vector<4x32xf32>
    %216 = arith.addf %213, %215 : vector<4x32xf32>
    %217 = math.tanh %216 : vector<4x32xf32>
    %cst_36 = arith.constant 1.000000e+00 : f32
    %218 = vector.broadcast %cst_36 : f32 to vector<4x32xf32>
    %219 = arith.subf %218, %212 : vector<4x32xf32>
    %220 = arith.mulf %219, %217 : vector<4x32xf32>
    %221 = arith.mulf %212, %192 : vector<4x32xf32>
    %222 = arith.addf %220, %221 : vector<4x32xf32>
    %cst_37 = arith.constant dense<0.000000e+00> : vector<4x96xf32>
    %223 = tpu.matmul %222, %11, %cst_37 {dimension_numbers = #tpu.dot_dimension_numbers<[1], [0], [0], [1], [0, 0, 1, 1], [], []>} : vector<4x32xf32>, vector<32x96xf32>, vector<4x96xf32> -> vector<4x96xf32>
    %224 = vector.broadcast %2 : vector<1x96xf32> to vector<4x96xf32>
    %225 = arith.addf %223, %224 : vector<4x96xf32>
    %226 = vector.extract_strided_slice %10 {offsets = [28, 0], sizes = [4, 96], strides = [1, 1]} : vector<32x96xf32> to vector<4x96xf32>
    %227 = vector.extract_strided_slice %226 {offsets = [0, 0], sizes = [4, 32], strides = [1, 1]} : vector<4x96xf32> to vector<4x32xf32>
    %228 = vector.extract_strided_slice %225 {offsets = [0, 0], sizes = [4, 32], strides = [1, 1]} : vector<4x96xf32> to vector<4x32xf32>
    %229 = arith.addf %227, %228 : vector<4x32xf32>
    %230 = arith.negf %229 : vector<4x32xf32>
    %231 = math.exp %230 : vector<4x32xf32>
    %cst_38 = arith.constant 1.000000e+00 : f32
    %232 = vector.broadcast %cst_38 : f32 to vector<4x32xf32>
    %233 = arith.addf %232, %231 : vector<4x32xf32>
    %234 = arith.divf %232, %233 : vector<4x32xf32>
    %235 = vector.extract_strided_slice %226 {offsets = [0, 32], sizes = [4, 32], strides = [1, 1]} : vector<4x96xf32> to vector<4x32xf32>
    %236 = vector.extract_strided_slice %225 {offsets = [0, 32], sizes = [4, 32], strides = [1, 1]} : vector<4x96xf32> to vector<4x32xf32>
    %237 = arith.addf %235, %236 : vector<4x32xf32>
    %238 = arith.negf %237 : vector<4x32xf32>
    %239 = math.exp %238 : vector<4x32xf32>
    %cst_39 = arith.constant 1.000000e+00 : f32
    %240 = vector.broadcast %cst_39 : f32 to vector<4x32xf32>
    %241 = arith.addf %240, %239 : vector<4x32xf32>
    %242 = arith.divf %240, %241 : vector<4x32xf32>
    %243 = vector.extract_strided_slice %226 {offsets = [0, 64], sizes = [4, 32], strides = [1, 1]} : vector<4x96xf32> to vector<4x32xf32>
    %244 = vector.extract_strided_slice %225 {offsets = [0, 64], sizes = [4, 32], strides = [1, 1]} : vector<4x96xf32> to vector<4x32xf32>
    %245 = arith.mulf %234, %244 : vector<4x32xf32>
    %246 = arith.addf %243, %245 : vector<4x32xf32>
    %247 = math.tanh %246 : vector<4x32xf32>
    %cst_40 = arith.constant 1.000000e+00 : f32
    %248 = vector.broadcast %cst_40 : f32 to vector<4x32xf32>
    %249 = arith.subf %248, %242 : vector<4x32xf32>
    %250 = arith.mulf %249, %247 : vector<4x32xf32>
    %251 = arith.mulf %242, %222 : vector<4x32xf32>
    %252 = arith.addf %250, %251 : vector<4x32xf32>
    %c28 = arith.constant 28 : index
    %c0_41 = arith.constant 0 : index
    %253 = vector.load %arg0[%c28, %c0_41] : memref<32x16xf32, #tpu.memory_space<vmem>>, vector<4x16xf32>
    %c1 = arith.constant 1 : index
    %c0_42 = arith.constant 0 : index
    %c0_43 = arith.constant 0 : index
    %254 = vector.load %arg1[%c1, %c0_42, %c0_43] : memref<2x16x96xf32, #tpu.memory_space<vmem>>, vector<1x16x96xf32>
    %255 = vector.shape_cast %254 : vector<1x16x96xf32> to vector<16x96xf32>
    %cst_44 = arith.constant dense<0.000000e+00> : vector<4x96xf32>
    %256 = tpu.matmul %253, %255, %cst_44 {dimension_numbers = #tpu.dot_dimension_numbers<[1], [0], [0], [1], [0, 0, 1, 1], [], []>} : vector<4x16xf32>, vector<16x96xf32>, vector<4x96xf32> -> vector<4x96xf32>
    %257 = vector.broadcast %3 : vector<1x96xf32> to vector<4x96xf32>
    %258 = arith.addf %256, %257 : vector<4x96xf32>
    %cst_45 = arith.constant 0.000000e+00 : f32
    %259 = vector.broadcast %cst_45 : f32 to vector<4x32xf32>
    %260 = vector.extract_strided_slice %258 {offsets = [0, 0], sizes = [4, 32], strides = [1, 1]} : vector<4x96xf32> to vector<4x32xf32>
    %261 = vector.extract_strided_slice %4 {offsets = [0, 0], sizes = [1, 32], strides = [1, 1]} : vector<1x96xf32> to vector<1x32xf32>
    %262 = vector.broadcast %261 : vector<1x32xf32> to vector<4x32xf32>
    %263 = arith.addf %260, %262 : vector<4x32xf32>
    %264 = arith.negf %263 : vector<4x32xf32>
    %265 = math.exp %264 : vector<4x32xf32>
    %cst_46 = arith.constant 1.000000e+00 : f32
    %266 = vector.broadcast %cst_46 : f32 to vector<4x32xf32>
    %267 = arith.addf %266, %265 : vector<4x32xf32>
    %268 = arith.divf %266, %267 : vector<4x32xf32>
    %269 = vector.extract_strided_slice %258 {offsets = [0, 32], sizes = [4, 32], strides = [1, 1]} : vector<4x96xf32> to vector<4x32xf32>
    %270 = vector.extract_strided_slice %4 {offsets = [0, 32], sizes = [1, 32], strides = [1, 1]} : vector<1x96xf32> to vector<1x32xf32>
    %271 = vector.broadcast %270 : vector<1x32xf32> to vector<4x32xf32>
    %272 = arith.addf %269, %271 : vector<4x32xf32>
    %273 = arith.negf %272 : vector<4x32xf32>
    %274 = math.exp %273 : vector<4x32xf32>
    %cst_47 = arith.constant 1.000000e+00 : f32
    %275 = vector.broadcast %cst_47 : f32 to vector<4x32xf32>
    %276 = arith.addf %275, %274 : vector<4x32xf32>
    %277 = arith.divf %275, %276 : vector<4x32xf32>
    %278 = vector.extract_strided_slice %258 {offsets = [0, 64], sizes = [4, 32], strides = [1, 1]} : vector<4x96xf32> to vector<4x32xf32>
    %279 = vector.extract_strided_slice %4 {offsets = [0, 64], sizes = [1, 32], strides = [1, 1]} : vector<1x96xf32> to vector<1x32xf32>
    %280 = vector.broadcast %279 : vector<1x32xf32> to vector<4x32xf32>
    %281 = arith.mulf %268, %280 : vector<4x32xf32>
    %282 = arith.addf %278, %281 : vector<4x32xf32>
    %283 = math.tanh %282 : vector<4x32xf32>
    %cst_48 = arith.constant 1.000000e+00 : f32
    %284 = vector.broadcast %cst_48 : f32 to vector<4x32xf32>
    %285 = arith.subf %284, %277 : vector<4x32xf32>
    %286 = arith.mulf %285, %283 : vector<4x32xf32>
    %287 = arith.mulf %277, %259 : vector<4x32xf32>
    %288 = arith.addf %286, %287 : vector<4x32xf32>
    %289 = tpu.concatenate %252, %288 in 1 : vector<4x32xf32>, vector<4x32xf32> -> vector<4x64xf32>
    %cst_49 = arith.constant 0.000000e+00 : f32
    %290 = vector.broadcast %cst_49 : f32 to vector<4x61xf32>
    %291 = vector.extract_strided_slice %289 {offsets = [0, 0], sizes = [4, 61], strides = [1, 1]} : vector<4x64xf32> to vector<4x61xf32>
    %c0_50 = arith.constant 0 : index
    %c0_51 = arith.constant 0 : index
    %c0_52 = arith.constant 0 : index
    %292 = vector.load %arg4[%c0_50, %c0_51, %c0_52] : memref<4x4x4xf32, #tpu.memory_space<vmem>>, vector<1x4x4xf32>
    %293 = vector.shape_cast %292 : vector<1x4x4xf32> to vector<4x4xf32>
    %cst_53 = arith.constant dense<0.000000e+00> : vector<4x61xf32>
    %294 = tpu.matmul %293, %291, %cst_53 {dimension_numbers = #tpu.dot_dimension_numbers<[1], [0], [0], [1], [0, 0, 1, 1], [], []>} : vector<4x4xf32>, vector<4x61xf32>, vector<4x61xf32> -> vector<4x61xf32>
    %295 = arith.addf %290, %294 : vector<4x61xf32>
    %296 = vector.extract_strided_slice %289 {offsets = [0, 1], sizes = [4, 61], strides = [1, 1]} : vector<4x64xf32> to vector<4x61xf32>
    %c1_54 = arith.constant 1 : index
    %c0_55 = arith.constant 0 : index
    %c0_56 = arith.constant 0 : index
    %297 = vector.load %arg4[%c1_54, %c0_55, %c0_56] : memref<4x4x4xf32, #tpu.memory_space<vmem>>, vector<1x4x4xf32>
    %298 = vector.shape_cast %297 : vector<1x4x4xf32> to vector<4x4xf32>
    %cst_57 = arith.constant dense<0.000000e+00> : vector<4x61xf32>
    %299 = tpu.matmul %298, %296, %cst_57 {dimension_numbers = #tpu.dot_dimension_numbers<[1], [0], [0], [1], [0, 0, 1, 1], [], []>} : vector<4x4xf32>, vector<4x61xf32>, vector<4x61xf32> -> vector<4x61xf32>
    %300 = arith.addf %295, %299 : vector<4x61xf32>
    %301 = vector.extract_strided_slice %289 {offsets = [0, 2], sizes = [4, 61], strides = [1, 1]} : vector<4x64xf32> to vector<4x61xf32>
    %c2 = arith.constant 2 : index
    %c0_58 = arith.constant 0 : index
    %c0_59 = arith.constant 0 : index
    %302 = vector.load %arg4[%c2, %c0_58, %c0_59] : memref<4x4x4xf32, #tpu.memory_space<vmem>>, vector<1x4x4xf32>
    %303 = vector.shape_cast %302 : vector<1x4x4xf32> to vector<4x4xf32>
    %cst_60 = arith.constant dense<0.000000e+00> : vector<4x61xf32>
    %304 = tpu.matmul %303, %301, %cst_60 {dimension_numbers = #tpu.dot_dimension_numbers<[1], [0], [0], [1], [0, 0, 1, 1], [], []>} : vector<4x4xf32>, vector<4x61xf32>, vector<4x61xf32> -> vector<4x61xf32>
    %305 = arith.addf %300, %304 : vector<4x61xf32>
    %306 = vector.extract_strided_slice %289 {offsets = [0, 3], sizes = [4, 61], strides = [1, 1]} : vector<4x64xf32> to vector<4x61xf32>
    %c3 = arith.constant 3 : index
    %c0_61 = arith.constant 0 : index
    %c0_62 = arith.constant 0 : index
    %307 = vector.load %arg4[%c3, %c0_61, %c0_62] : memref<4x4x4xf32, #tpu.memory_space<vmem>>, vector<1x4x4xf32>
    %308 = vector.shape_cast %307 : vector<1x4x4xf32> to vector<4x4xf32>
    %cst_63 = arith.constant dense<0.000000e+00> : vector<4x61xf32>
    %309 = tpu.matmul %308, %306, %cst_63 {dimension_numbers = #tpu.dot_dimension_numbers<[1], [0], [0], [1], [0, 0, 1, 1], [], []>} : vector<4x4xf32>, vector<4x61xf32>, vector<4x61xf32> -> vector<4x61xf32>
    %310 = arith.addf %305, %309 : vector<4x61xf32>
    %c0_64 = arith.constant 0 : index
    %c0_65 = arith.constant 0 : index
    %311 = vector.load %arg5[%c0_64, %c0_65] : memref<4x1xf32, #tpu.memory_space<vmem>>, vector<4x1xf32>
    %312 = vector.broadcast %311 : vector<4x1xf32> to vector<4x61xf32>
    %313 = arith.addf %310, %312 : vector<4x61xf32>
    %c0_66 = arith.constant 0 : index
    %c0_67 = arith.constant 0 : index
    %314 = vector.load %arg6[%c0_66, %c0_67] : memref<61x5xf32, #tpu.memory_space<vmem>>, vector<61x5xf32>
    %cst_68 = arith.constant dense<0.000000e+00> : vector<4x5xf32>
    %315 = tpu.matmul %313, %314, %cst_68 {dimension_numbers = #tpu.dot_dimension_numbers<[1], [0], [0], [1], [0, 0, 1, 1], [], []>} : vector<4x61xf32>, vector<61x5xf32>, vector<4x5xf32> -> vector<4x5xf32>
    %c0_69 = arith.constant 0 : index
    %c0_70 = arith.constant 0 : index
    %316 = vector.load %arg7[%c0_69, %c0_70] : memref<1x5xf32, #tpu.memory_space<vmem>>, vector<1x5xf32>
    %317 = vector.broadcast %316 : vector<1x5xf32> to vector<4x5xf32>
    %318 = arith.addf %315, %317 : vector<4x5xf32>
    %c0_71 = arith.constant 0 : index
    %c0_72 = arith.constant 0 : index
    %319 = vector.load %arg8[%c0_71, %c0_72] : memref<4x5xf32, #tpu.memory_space<vmem>>, vector<4x5xf32>
    tpu.vector_store %arg8[%c0_71, %c0_72], %318 {strides = array<i32>} : memref<4x5xf32, #tpu.memory_space<vmem>>, vector<4x5xf32>,
    return
  }
}

</mosaic_0001>

<llo_original>
// kernel: tpu_custom_call.1
$region0: #{tpu_custom_call.1}
  #allocation0 [shape = 'u32[]', space=smem, size = 0x4, offset = 0x4, fixed_abs, tag = 'smem constant byte address 0x4 - core index']
  #allocation1 [shape = 'u32[144,128]{1,0:T(1,128)}', space=vmem, size = 0x12000, scoped, tag = 'internal scratch']
  %s0 = inlined_call_operand.vmem [shape: f32[32,16], index: 0, kind: input, shape index: {}]
  %s1 = inlined_call_operand.vmem [shape: f32[2,16,96], index: 1, kind: input, shape index: {}]
  %s2 = inlined_call_operand.vmem [shape: f32[32,96], index: 2, kind: input, shape index: {}]
  %s3 = inlined_call_operand.vmem [shape: f32[4,96], index: 3, kind: input, shape index: {}]
  %s4 = inlined_call_operand.vmem [shape: f32[4,4,4], index: 4, kind: input, shape index: {}]
  %s5 = inlined_call_operand.vmem [shape: f32[4,1], index: 5, kind: input, shape index: {}]
  %s6 = inlined_call_operand.vmem [shape: f32[61,5], index: 6, kind: input, shape index: {}]
  %s7 = inlined_call_operand.vmem [shape: f32[1,5], index: 7, kind: input, shape index: {}]
  %s8 = inlined_call_operand.hbm [shape: f32[4,5], index: 8, kind: output, shape index: {}]
  %s9 = sld [smem:[#allocation0]]
  $region42: #{tpu_custom_call.1} parent=0
    _
  %s11 = ssub.s32 1, %s9
  %s12 = scalar_select 0, %s11, %s9
  $region1: #{tpu_custom_call.1} parent=0
    #allocation2 [shape = 'u8[2048]{0}', space=vmem, size = 0x800, scoped, tag = 'output window, operand 0, single buffered']
    #allocation3 [shape = 's32[1]{0}', space=sflag, size = 0x4, scoped, tag = 'scoped memory for tpu_custom_call.1']
    %13 = vsyncpa [#allocation3], 0
    // Predicated region
    $region2: #{tpu_custom_call.1} parent=1 // pred_check
      _
    $region3: #{tpu_custom_call.1} parent=1 // pred_check_branch
      %15 = sbr.rel (0) target = $region5
    $region4: #{tpu_custom_call.1} parent=1 // pred_region
      _
    $region5: #{tpu_custom_call.1} parent=1 // pred_fallthru
      _
    // Predicated region
    $region6: #{tpu_custom_call.1} parent=1 // pred_check
      _
    $region7: #{tpu_custom_call.1} parent=1 // pred_check_branch
      %17 = sbr.rel (0) target = $region9
    $region8: #{tpu_custom_call.1} parent=1 // pred_region
      _
    $region9: #{tpu_custom_call.1} parent=1 // pred_fallthru
      _
    // Predicated region
    $region10: #{tpu_custom_call.1} parent=1 // pred_check
      _
    $region11: #{tpu_custom_call.1} parent=1 // pred_check_branch
      %19 = sbr.rel (0) target = $region13
    $region12: #{tpu_custom_call.1} parent=1 // pred_region
      _
    $region13: #{tpu_custom_call.1} parent=1 // pred_fallthru
      _
    // Predicated region
    $region14: #{tpu_custom_call.1} parent=1 // pred_check
      _
    $region15: #{tpu_custom_call.1} parent=1 // pred_check_branch
      %21 = sbr.rel (0) target = $region17
    $region16: #{tpu_custom_call.1} parent=1 // pred_region
      _
    $region17: #{tpu_custom_call.1} parent=1 // pred_fallthru
      _
    // Predicated region
    $region18: #{tpu_custom_call.1} parent=1 // pred_check
      _
    $region19: #{tpu_custom_call.1} parent=1 // pred_check_branch
      %23 = sbr.rel (0) target = $region21
    $region20: #{tpu_custom_call.1} parent=1 // pred_region
      _
    $region21: #{tpu_custom_call.1} parent=1 // pred_fallthru
      _
    // Predicated region
    $region22: #{tpu_custom_call.1} parent=1 // pred_check
      _
    $region23: #{tpu_custom_call.1} parent=1 // pred_check_branch
      %25 = sbr.rel (0) target = $region25
    $region24: #{tpu_custom_call.1} parent=1 // pred_region
      _
    $region25: #{tpu_custom_call.1} parent=1 // pred_fallthru
      _
    // Predicated region
    $region26: #{tpu_custom_call.1} parent=1 // pred_check
      _
    $region27: #{tpu_custom_call.1} parent=1 // pred_check_branch
      %27 = sbr.rel (0) target = $region29
    $region28: #{tpu_custom_call.1} parent=1 // pred_region
      _
    $region29: #{tpu_custom_call.1} parent=1 // pred_fallthru
      _
    // Predicated region
    $region30: #{tpu_custom_call.1} parent=1 // pred_check
      _
    $region31: #{tpu_custom_call.1} parent=1 // pred_check_branch
      %29 = sbr.rel (0) target = $region33
    $region32: #{tpu_custom_call.1} parent=1 // pred_region
      _
    $region33: #{tpu_custom_call.1} parent=1 // pred_fallthru
      _
    %v30 = vld [vmem:[%s3] sm:$0xf]
    %v31 = vld [vmem:[%s0] sm:$0xff]
    %v32 = vld [vmem:[%s0 + $0x8] sm:$0xff]
    %v33 = vld [vmem:[%s0 + $0x10] sm:$0xff]
    %v34 = vld [vmem:[%s0 + $0x18] sm:$0xff]
    %v35 = vld [vmem:[%s1] sm:$0xff]
    %v36 = vld [vmem:[%s1 + $0x8] sm:$0xff]
    %v37 = vlaneseq
    %v38 = vshrl.u32 %v37, 7
    %v39 = vsub.s32 0, %v38
    %v40 = vrot.slane %v30, %v39
    %vm41 = vcmask 130048
    %v43 = vsel %vm41, %v31, 0
    %v46 = vsel %vm41, %v32, 0
    %v49 = vsel %vm41, %v33, 0
    %v52 = vsel %vm41, %v34, 0
    %54 = vmatprep.subr.mxu0 0.0
    %55 = vmatpush1.msra.mxu0 %v35
    %56 = vmatprep.subr.mxu0 0.0
    %57 = vmatpush1.msra.mxu0 %v36
    %58 = vmatprep.subr.mxu0 0.0
    %59 = vmatpush1.msra.mxu0 0.0
    %60 = vmatprep.subr.mxu0 0.0
    %61 = vmatpush1.msra.mxu0 0.0
    %62 = vmatprep.subr.mxu0 0.0
    %63 = vmatpush1.msra.mxu0 0.0
    %64 = vmatprep.subr.mxu0 0.0
    %65 = vmatpush1.msra.mxu0 0.0
    %66 = vmatprep.subr.mxu0 0.0
    %67 = vmatpush1.msra.mxu0 0.0
    %68 = vmatprep.subr.mxu0 0.0
    %69 = vmatpush1.msra.mxu0 0.0
    %70 = vmatprep.subr.mxu0 0.0
    %71 = vmatpush1.msra.mxu0 0.0
    %72 = vmatprep.subr.mxu0 0.0
    %73 = vmatpush1.msra.mxu0 0.0
    %74 = vmatprep.subr.mxu0 0.0
    %75 = vmatpush1.msra.mxu0 0.0
    %76 = vmatprep.subr.mxu0 0.0
    %77 = vmatpush1.msra.mxu0 0.0
    %78 = vmatprep.subr.mxu0 0.0
    %79 = vmatpush1.msra.mxu0 0.0
    %80 = vmatprep.subr.mxu0 0.0
    %81 = vmatpush1.msra.mxu0 0.0
    %82 = vmatprep.subr.mxu0 0.0
    %83 = vmatpush1.msra.mxu0 0.0
    %84 = vmatprep.subr.mxu0 0.0
    %85 = vmatpush1.msra.mxu0 0.0
    %86 = vmatprep.subr.mxu0 0.0
    %87 = vmatpush1.msra.mxu0 0.0
    %88 = vmatprep.subr.mxu0 0.0
    %89 = vmatpush1.msra.mxu0 0.0
    %90 = vmatprep.subr.mxu0 0.0
    %91 = vmatpush1.msra.mxu0 0.0
    %92 = vmatprep.subr.mxu0 0.0
    %93 = vmatpush1.msra.mxu0 0.0
    %94 = vmatprep.subr.mxu0 0.0
    %95 = vmatpush1.msra.mxu0 0.0
    %96 = vmatprep.subr.mxu0 0.0
    %97 = vmatpush1.msra.mxu0 0.0
    %98 = vmatprep.subr.mxu0 0.0
    %99 = vmatpush1.msra.mxu0 0.0
    %100 = vmatprep.subr.mxu0 0.0
    %101 = vmatpush1.msra.mxu0 0.0
    %102 = vmatprep.subr.mxu0 0.0
    %103 = vmatpush1.msra.mxu0 0.0
    %104 = vmatprep.subr.mxu0 0.0
    %105 = vmatpush1.msra.mxu0 0.0
    %106 = vmatprep.subr.mxu0 0.0
    %107 = vmatpush1.msra.mxu0 0.0
    %108 = vmatprep.subr.mxu0 0.0
    %109 = vmatpush1.msra.mxu0 0.0
    %110 = vmatprep.subr.mxu0 0.0
    %111 = vmatpush1.msra.mxu0 0.0
    %112 = vmatprep.subr.mxu0 0.0
    %113 = vmatpush1.msra.mxu0 0.0
    %114 = vmatprep.subr.mxu0 0.0
    %115 = vmatpush1.msra.mxu0 0.0
    %116 = vmatprep.subr.mxu0 0.0
    %117 = vmatpush1.msra.mxu0 0.0
    %118 = vmatprep.mubr.f32.mxu0 0.0
    %119 = vmatmul.mubr.f32.gmra.mrb[0].mxu0 %v43
    %v120 = vpop.f32.mrb[0].mxu0
    %v121 = vadd.f32 %v40, %v120
    %v122 = vpop.f32.mrb[0].mxu0
    %123 = vmatprep.mubr.f32.mxu0 0.0
    %124 = vmatmul.mubr.f32.gmra.mrb[0].mxu0 %v46
    %v125 = vpop.f32.mrb[0].mxu0
    %v126 = vadd.f32 %v40, %v125
    %v127 = vpop.f32.mrb[0].mxu0
    %128 = vmatprep.mubr.f32.mxu0 0.0
    %129 = vmatmul.mubr.f32.gmra.mrb[0].mxu0 %v49
    %v130 = vpop.f32.mrb[0].mxu0
    %v131 = vadd.f32 %v40, %v130
    %v132 = vpop.f32.mrb[0].mxu0
    %133 = vmatprep.mubr.f32.mxu0 0.0
    %134 = vmatmul.mubr.f32.gmra.mrb[0].mxu0 %v52
    %v135 = vpop.f32.mrb[0].mxu0
    %v136 = vadd.f32 %v40, %v135
    %v137 = vpop.f32.mrb[0].mxu0
    %138 = vdwg.mxu0
    %v139 = vld [vmem:[%s2] sm:$0xff]
    %v140 = vld [vmem:[%s2 + $0x8] sm:$0xff]
    %v141 = vld [vmem:[%s2 + $0x10] sm:$0xff]
    %v142 = vld [vmem:[%s2 + $0x18] sm:$0xff]
    %v143 = vlaneseq
    %v144 = vshrl.u32 %v143, 7
    %v145 = vsub.s32 1, %v144
    %v146 = vrot.slane %v30, %v145
    %vm147 = vcmask 261120
    %v149 = vsel %vm147, 0.0, 0
    %151 = vmatprep.subr.mxu0 0.0
    %152 = vmatpush1.msra.mxu0 %v139
    %153 = vmatprep.subr.mxu0 0.0
    %154 = vmatpush1.msra.mxu0 %v140
    %155 = vmatprep.subr.mxu0 0.0
    %156 = vmatpush1.msra.mxu0 %v141
    %157 = vmatprep.subr.mxu0 0.0
    %158 = vmatpush1.msra.mxu0 %v142
    %159 = vmatprep.subr.mxu0 0.0
    %160 = vmatpush1.msra.mxu0 0.0
    %161 = vmatprep.subr.mxu0 0.0
    %162 = vmatpush1.msra.mxu0 0.0
    %163 = vmatprep.subr.mxu0 0.0
    %164 = vmatpush1.msra.mxu0 0.0
    %165 = vmatprep.subr.mxu0 0.0
    %166 = vmatpush1.msra.mxu0 0.0
    %167 = vmatprep.subr.mxu0 0.0
    %168 = vmatpush1.msra.mxu0 0.0
    %169 = vmatprep.subr.mxu0 0.0
    %170 = vmatpush1.msra.mxu0 0.0
    %171 = vmatprep.subr.mxu0 0.0
    %172 = vmatpush1.msra.mxu0 0.0
    %173 = vmatprep.subr.mxu0 0.0
    %174 = vmatpush1.msra.mxu0 0.0
    %175 = vmatprep.subr.mxu0 0.0
    %176 = vmatpush1.msra.mxu0 0.0
    %177 = vmatprep.subr.mxu0 0.0
    %178 = vmatpush1.msra.mxu0 0.0
    %179 = vmatprep.subr.mxu0 0.0
    %180 = vmatpush1.msra.mxu0 0.0
    %181 = vmatprep.subr.mxu0 0.0
    %182 = vmatpush1.msra.mxu0 0.0
    %183 = vmatprep.subr.mxu0 0.0
    %184 = vmatpush1.msra.mxu0 0.0
    %185 = vmatprep.subr.mxu0 0.0
    %186 = vmatpush1.msra.mxu0 0.0
    %187 = vmatprep.subr.mxu0 0.0
    %188 = vmatpush1.msra.mxu0 0.0
    %189 = vmatprep.subr.mxu0 0.0
    %190 = vmatpush1.msra.mxu0 0.0
    %191 = vmatprep.subr.mxu0 0.0
    %192 = vmatpush1.msra.mxu0 0.0
    %193 = vmatprep.subr.mxu0 0.0
    %194 = vmatpush1.msra.mxu0 0.0
    %195 = vmatprep.subr.mxu0 0.0
    %196 = vmatpush1.msra.mxu0 0.0
    %197 = vmatprep.subr.mxu0 0.0
    %198 = vmatpush1.msra.mxu0 0.0
    %199 = vmatprep.subr.mxu0 0.0
    %200 = vmatpush1.msra.mxu0 0.0
    %201 = vmatprep.subr.mxu0 0.0
    %202 = vmatpush1.msra.mxu0 0.0
    %203 = vmatprep.subr.mxu0 0.0
    %204 = vmatpush1.msra.mxu0 0.0
    %205 = vmatprep.subr.mxu0 0.0
    %206 = vmatpush1.msra.mxu0 0.0
    %207 = vmatprep.subr.mxu0 0.0
    %208 = vmatpush1.msra.mxu0 0.0
    %209 = vmatprep.subr.mxu0 0.0
    %210 = vmatpush1.msra.mxu0 0.0
    %211 = vmatprep.subr.mxu0 0.0
    %212 = vmatpush1.msra.mxu0 0.0
    %213 = vmatprep.subr.mxu0 0.0
    %214 = vmatpush1.msra.mxu0 0.0
    %215 = vmatprep.mubr.f32.mxu0 0.0
    %216 = vmatmul.mubr.f32.gmra.mrb[0].mxu0 %v149
    %v217 = vpop.f32.mrb[0].mxu0
    %v218 = vadd.f32 %v146, %v217
    %v219 = vpop.f32.mrb[0].mxu0
    %220 = vdwg.mxu0
    %v221 = vadd.f32 %v121, %v218
    %v222 = vxor.u32 %v221, 2147483648
    %v223 = vmul.f32 %v222, 1.442695
    %v224 = vpow.pop %v223
    %v225 = vadd.f32 %v224, 1.0
    %v226 = vrcp.pop %v225
    %v227 = vmul.f32 1.0, %v226
    %229 = vrot.lane.b32.xlu0 %v218, 64
    %v230 = vpop.permute.xlu0 %229
    %v232 = vmul.f32 %v227, %v230
    %234 = vrot.lane.b32.xlu0 %v232, 64
    %v235 = vpop.permute.xlu0 %234
    %v237 = vadd.f32 %v121, %v235
    %v238 = vtanh.pop %v237
    %v239 = vsub.f32 1.0, %v227
    %241 = vrot.lane.b32.xlu0 %v238, 96
    %v242 = vpop.permute.xlu0 %241
    %v244 = vmul.f32 %v239, %v242
    %v245 = vmul.f32 %v227, 0.0
    %v246 = vadd.f32 %v244, %v245
    %248 = vrot.lane.b32.xlu0 %v246, 96
    %v249 = vpop.permute.xlu0 %248
    %v250 = vsel %vm147, %v249, 0
    %252 = vmatprep.subr.mxu0 0.0
    %253 = vmatpush1.msra.mxu0 %v139
    %254 = vmatprep.subr.mxu0 0.0
    %255 = vmatpush1.msra.mxu0 %v140
    %256 = vmatprep.subr.mxu0 0.0
    %257 = vmatpush1.msra.mxu0 %v141
    %258 = vmatprep.subr.mxu0 0.0
    %259 = vmatpush1.msra.mxu0 %v142
    %260 = vmatprep.subr.mxu0 0.0
    %261 = vmatpush1.msra.mxu0 0.0
    %262 = vmatprep.subr.mxu0 0.0
    %263 = vmatpush1.msra.mxu0 0.0
    %264 = vmatprep.subr.mxu0 0.0
    %265 = vmatpush1.msra.mxu0 0.0
    %266 = vmatprep.subr.mxu0 0.0
    %267 = vmatpush1.msra.mxu0 0.0
    %268 = vmatprep.subr.mxu0 0.0
    %269 = vmatpush1.msra.mxu0 0.0
    %270 = vmatprep.subr.mxu0 0.0
    %271 = vmatpush1.msra.mxu0 0.0
    %272 = vmatprep.subr.mxu0 0.0
    %273 = vmatpush1.msra.mxu0 0.0
    %274 = vmatprep.subr.mxu0 0.0
    %275 = vmatpush1.msra.mxu0 0.0
    %276 = vmatprep.subr.mxu0 0.0
    %277 = vmatpush1.msra.mxu0 0.0
    %278 = vmatprep.subr.mxu0 0.0
    %279 = vmatpush1.msra.mxu0 0.0
    %280 = vmatprep.subr.mxu0 0.0
    %281 = vmatpush1.msra.mxu0 0.0
    %282 = vmatprep.subr.mxu0 0.0
    %283 = vmatpush1.msra.mxu0 0.0
    %284 = vmatprep.subr.mxu0 0.0
    %285 = vmatpush1.msra.mxu0 0.0
    %286 = vmatprep.subr.mxu0 0.0
    %287 = vmatpush1.msra.mxu0 0.0
    %288 = vmatprep.subr.mxu0 0.0
    %289 = vmatpush1.msra.mxu0 0.0
    %290 = vmatprep.subr.mxu0 0.0
    %291 = vmatpush1.msra.mxu0 0.0
    %292 = vmatprep.subr.mxu0 0.0
    %293 = vmatpush1.msra.mxu0 0.0
    %294 = vmatprep.subr.mxu0 0.0
    %295 = vmatpush1.msra.mxu0 0.0
    %296 = vmatprep.subr.mxu0 0.0
    %297 = vmatpush1.msra.mxu0 0.0
    %298 = vmatprep.subr.mxu0 0.0
    %299 = vmatpush1.msra.mxu0 0.0
    %300 = vmatprep.subr.mxu0 0.0
    %301 = vmatpush1.msra.mxu0 0.0
    %302 = vmatprep.subr.mxu0 0.0
    %303 = vmatpush1.msra.mxu0 0.0
    %304 = vmatprep.subr.mxu0 0.0
    %305 = vmatpush1.msra.mxu0 0.0
    %306 = vmatprep.subr.mxu0 0.0
    %307 = vmatpush1.msra.mxu0 0.0
    %308 = vmatprep.subr.mxu0 0.0
    %309 = vmatpush1.msra.mxu0 0.0
    %310 = vmatprep.subr.mxu0 0.0
    %311 = vmatpush1.msra.mxu0 0.0
    %312 = vmatprep.subr.mxu0 0.0
    %313 = vmatpush1.msra.mxu0 0.0
    %314 = vmatprep.subr.mxu0 0.0
    %315 = vmatpush1.msra.mxu0 0.0
    %316 = vmatprep.mubr.f32.mxu0 0.0
    %317 = vmatmul.mubr.f32.gmra.mrb[0].mxu0 %v250
    %v318 = vpop.f32.mrb[0].mxu0
    %v319 = vadd.f32 %v146, %v318
    %v320 = vpop.f32.mrb[0].mxu0
    %321 = vdwg.mxu0
    %v323 = vrot.slane %v319, 4
    %v325 = vadd.f32 %v121, %v323
    %v326 = vxor.u32 %v325, 2147483648
    %v327 = vmul.f32 %v326, 1.442695
    %v328 = vpow.pop %v327
    %v329 = vadd.f32 %v328, 1.0
    %v330 = vrcp.pop %v329
    %v331 = vmul.f32 1.0, %v330
    %332 = vrot.lane.b32.xlu0 %v323, 64
    %v333 = vpop.permute.xlu0 %332
    %v335 = vmul.f32 %v331, %v333
    %337 = vrot.lane.b32.xlu0 %v335, 64
    %v338 = vpop.permute.xlu0 %337
    %v340 = vadd.f32 %v121, %v338
    %v341 = vtanh.pop %v340
    %v342 = vsub.f32 1.0, %v331
    %344 = vrot.lane.b32.xlu0 %v341, 96
    %v345 = vpop.permute.xlu0 %344
    %v347 = vmul.f32 %v342, %v345
    %v348 = vrot.slane %v246, 4
    %v350 = vmul.f32 %v331, %v348
    %v351 = vadd.f32 %v347, %v350
    %v353 = vrot.slane %v351, 4
    %354 = vrot.lane.b32.xlu0 %v353, 96
    %v355 = vpop.permute.xlu0 %354
    %v356 = vsel %vm147, %v355, 0
    %358 = vmatprep.subr.mxu0 0.0
    %359 = vmatpush1.msra.mxu0 %v139
    %360 = vmatprep.subr.mxu0 0.0
    %361 = vmatpush1.msra.mxu0 %v140
    %362 = vmatprep.subr.mxu0 0.0
    %363 = vmatpush1.msra.mxu0 %v141
    %364 = vmatprep.subr.mxu0 0.0
    %365 = vmatpush1.msra.mxu0 %v142
    %366 = vmatprep.subr.mxu0 0.0
    %367 = vmatpush1.msra.mxu0 0.0
    %368 = vmatprep.subr.mxu0 0.0
    %369 = vmatpush1.msra.mxu0 0.0
    %370 = vmatprep.subr.mxu0 0.0
    %371 = vmatpush1.msra.mxu0 0.0
    %372 = vmatprep.subr.mxu0 0.0
    %373 = vmatpush1.msra.mxu0 0.0
    %374 = vmatprep.subr.mxu0 0.0
    %375 = vmatpush1.msra.mxu0 0.0
    %376 = vmatprep.subr.mxu0 0.0
    %377 = vmatpush1.msra.mxu0 0.0
    %378 = vmatprep.subr.mxu0 0.0
    %379 = vmatpush1.msra.mxu0 0.0
    %380 = vmatprep.subr.mxu0 0.0
    %381 = vmatpush1.msra.mxu0 0.0
    %382 = vmatprep.subr.mxu0 0.0
    %383 = vmatpush1.msra.mxu0 0.0
    %384 = vmatprep.subr.mxu0 0.0
    %385 = vmatpush1.msra.mxu0 0.0
    %386 = vmatprep.subr.mxu0 0.0
    %387 = vmatpush1.msra.mxu0 0.0
    %388 = vmatprep.subr.mxu0 0.0
    %389 = vmatpush1.msra.mxu0 0.0
    %390 = vmatprep.subr.mxu0 0.0
    %391 = vmatpush1.msra.mxu0 0.0
    %392 = vmatprep.subr.mxu0 0.0
    %393 = vmatpush1.msra.mxu0 0.0
    %394 = vmatprep.subr.mxu0 0.0
    %395 = vmatpush1.msra.mxu0 0.0
    %396 = vmatprep.subr.mxu0 0.0
    %397 = vmatpush1.msra.mxu0 0.0
    %398 = vmatprep.subr.mxu0 0.0
    %399 = vmatpush1.msra.mxu0 0.0
    %400 = vmatprep.subr.mxu0 0.0
    %401 = vmatpush1.msra.mxu0 0.0
    %402 = vmatprep.subr.mxu0 0.0
    %403 = vmatpush1.msra.mxu0 0.0
    %404 = vmatprep.subr.mxu0 0.0
    %405 = vmatpush1.msra.mxu0 0.0
    %406 = vmatprep.subr.mxu0 0.0
    %407 = vmatpush1.msra.mxu0 0.0
    %408 = vmatprep.subr.mxu0 0.0
    %409 = vmatpush1.msra.mxu0 0.0
    %410 = vmatprep.subr.mxu0 0.0
    %411 = vmatpush1.msra.mxu0 0.0
    %412 = vmatprep.subr.mxu0 0.0
    %413 = vmatpush1.msra.mxu0 0.0
    %414 = vmatprep.subr.mxu0 0.0
    %415 = vmatpush1.msra.mxu0 0.0
    %416 = vmatprep.subr.mxu0 0.0
    %417 = vmatpush1.msra.mxu0 0.0
    %418 = vmatprep.subr.mxu0 0.0
    %419 = vmatpush1.msra.mxu0 0.0
    %420 = vmatprep.subr.mxu0 0.0
    %421 = vmatpush1.msra.mxu0 0.0
    %422 = vmatprep.mubr.f32.mxu0 0.0
    %423 = vmatmul.mubr.f32.gmra.mrb[0].mxu0 %v356
    %v424 = vpop.f32.mrb[0].mxu0
    %v425 = vadd.f32 %v146, %v424
    %v426 = vpop.f32.mrb[0].mxu0
    %427 = vdwg.mxu0
    %v428 = vadd.f32 %v126, %v425
    %v429 = vxor.u32 %v428, 2147483648
    %v430 = vmul.f32 %v429, 1.442695
    %v431 = vpow.pop %v430
    %v432 = vadd.f32 %v431, 1.0
    %v433 = vrcp.pop %v432
    %v434 = vmul.f32 1.0, %v433
    %436 = vrot.lane.b32.xlu0 %v425, 64
    %v437 = vpop.permute.xlu0 %436
    %v439 = vmul.f32 %v434, %v437
    %441 = vrot.lane.b32.xlu0 %v439, 64
    %v442 = vpop.permute.xlu0 %441
    %v444 = vadd.f32 %v126, %v442
    %v445 = vtanh.pop %v444
    %v446 = vsub.f32 1.0, %v434
    %448 = vrot.lane.b32.xlu0 %v445, 96
    %v449 = vpop.permute.xlu0 %448
    %v451 = vmul.f32 %v446, %v449
    %v453 = vmul.f32 %v434, %v353
    %v454 = vadd.f32 %v451, %v453
    %456 = vrot.lane.b32.xlu0 %v454, 96
    %v457 = vpop.permute.xlu0 %456
    %v458 = vsel %vm147, %v457, 0
    %460 = vmatprep.subr.mxu0 0.0
    %461 = vmatpush1.msra.mxu0 %v139
    %462 = vmatprep.subr.mxu0 0.0
    %463 = vmatpush1.msra.mxu0 %v140
    %464 = vmatprep.subr.mxu0 0.0
    %465 = vmatpush1.msra.mxu0 %v141
    %466 = vmatprep.subr.mxu0 0.0
    %467 = vmatpush1.msra.mxu0 %v142
    %468 = vmatprep.subr.mxu0 0.0
    %469 = vmatpush1.msra.mxu0 0.0
    %470 = vmatprep.subr.mxu0 0.0
    %471 = vmatpush1.msra.mxu0 0.0
    %472 = vmatprep.subr.mxu0 0.0
    %473 = vmatpush1.msra.mxu0 0.0
    %474 = vmatprep.subr.mxu0 0.0
    %475 = vmatpush1.msra.mxu0 0.0
    %476 = vmatprep.subr.mxu0 0.0
    %477 = vmatpush1.msra.mxu0 0.0
    %478 = vmatprep.subr.mxu0 0.0
    %479 = vmatpush1.msra.mxu0 0.0
    %480 = vmatprep.subr.mxu0 0.0
    %481 = vmatpush1.msra.mxu0 0.0
    %482 = vmatprep.subr.mxu0 0.0
    %483 = vmatpush1.msra.mxu0 0.0
    %484 = vmatprep.subr.mxu0 0.0
    %485 = vmatpush1.msra.mxu0 0.0
    %486 = vmatprep.subr.mxu0 0.0
    %487 = vmatpush1.msra.mxu0 0.0
    %488 = vmatprep.subr.mxu0 0.0
    %489 = vmatpush1.msra.mxu0 0.0
    %490 = vmatprep.subr.mxu0 0.0
    %491 = vmatpush1.msra.mxu0 0.0
    %492 = vmatprep.subr.mxu0 0.0
    %493 = vmatpush1.msra.mxu0 0.0
    %494 = vmatprep.subr.mxu0 0.0
    %495 = vmatpush1.msra.mxu0 0.0
    %496 = vmatprep.subr.mxu0 0.0
    %497 = vmatpush1.msra.mxu0 0.0
    %498 = vmatprep.subr.mxu0 0.0
    %499 = vmatpush1.msra.mxu0 0.0
    %500 = vmatprep.subr.mxu0 0.0
    %501 = vmatpush1.msra.mxu0 0.0
    %502 = vmatprep.subr.mxu0 0.0
    %503 = vmatpush1.msra.mxu0 0.0
    %504 = vmatprep.subr.mxu0 0.0
    %505 = vmatpush1.msra.mxu0 0.0
    %506 = vmatprep.subr.mxu0 0.0
    %507 = vmatpush1.msra.mxu0 0.0
    %508 = vmatprep.subr.mxu0 0.0
    %509 = vmatpush1.msra.mxu0 0.0
    %510 = vmatprep.subr.mxu0 0.0
    %511 = vmatpush1.msra.mxu0 0.0
    %512 = vmatprep.subr.mxu0 0.0
    %513 = vmatpush1.msra.mxu0 0.0
    %514 = vmatprep.subr.mxu0 0.0
    %515 = vmatpush1.msra.mxu0 0.0
    %516 = vmatprep.subr.mxu0 0.0
    %517 = vmatpush1.msra.mxu0 0.0
    %518 = vmatprep.subr.mxu0 0.0
    %519 = vmatpush1.msra.mxu0 0.0
    %520 = vmatprep.subr.mxu0 0.0
    %521 = vmatpush1.msra.mxu0 0.0
    %522 = vmatprep.subr.mxu0 0.0
    %523 = vmatpush1.msra.mxu0 0.0
    %524 = vmatprep.mubr.f32.mxu0 0.0
    %525 = vmatmul.mubr.f32.gmra.mrb[0].mxu0 %v458
    %v526 = vpop.f32.mrb[0].mxu0
    %v527 = vadd.f32 %v146, %v526
    %v528 = vpop.f32.mrb[0].mxu0
    %529 = vdwg.mxu0
    %v531 = vrot.slane %v527, 4
    %v533 = vadd.f32 %v126, %v531
    %v534 = vxor.u32 %v533, 2147483648
    %v535 = vmul.f32 %v534, 1.442695
    %v536 = vpow.pop %v535
    %v537 = vadd.f32 %v536, 1.0
    %v538 = vrcp.pop %v537
    %v539 = vmul.f32 1.0, %v538
    %540 = vrot.lane.b32.xlu0 %v531, 64
    %v541 = vpop.permute.xlu0 %540
    %v543 = vmul.f32 %v539, %v541
    %545 = vrot.lane.b32.xlu0 %v543, 64
    %v546 = vpop.permute.xlu0 %545
    %v548 = vadd.f32 %v126, %v546
    %v549 = vtanh.pop %v548
    %v550 = vsub.f32 1.0, %v539
    %552 = vrot.lane.b32.xlu0 %v549, 96
    %v553 = vpop.permute.xlu0 %552
    %v555 = vmul.f32 %v550, %v553
    %v556 = vrot.slane %v454, 4
    %v558 = vmul.f32 %v539, %v556
    %v559 = vadd.f32 %v555, %v558
    %v561 = vrot.slane %v559, 4
    %562 = vrot.lane.b32.xlu0 %v561, 96
    %v563 = vpop.permute.xlu0 %562
    %v564 = vsel %vm147, %v563, 0
    %566 = vmatprep.subr.mxu0 0.0
    %567 = vmatpush1.msra.mxu0 %v139
    %568 = vmatprep.subr.mxu0 0.0
    %569 = vmatpush1.msra.mxu0 %v140
    %570 = vmatprep.subr.mxu0 0.0
    %571 = vmatpush1.msra.mxu0 %v141
    %572 = vmatprep.subr.mxu0 0.0
    %573 = vmatpush1.msra.mxu0 %v142
    %574 = vmatprep.subr.mxu0 0.0
    %575 = vmatpush1.msra.mxu0 0.0
    %576 = vmatprep.subr.mxu0 0.0
    %577 = vmatpush1.msra.mxu0 0.0
    %578 = vmatprep.subr.mxu0 0.0
    %579 = vmatpush1.msra.mxu0 0.0
    %580 = vmatprep.subr.mxu0 0.0
    %581 = vmatpush1.msra.mxu0 0.0
    %582 = vmatprep.subr.mxu0 0.0
    %583 = vmatpush1.msra.mxu0 0.0
    %584 = vmatprep.subr.mxu0 0.0
    %585 = vmatpush1.msra.mxu0 0.0
    %586 = vmatprep.subr.mxu0 0.0
    %587 = vmatpush1.msra.mxu0 0.0
    %588 = vmatprep.subr.mxu0 0.0
    %589 = vmatpush1.msra.mxu0 0.0
    %590 = vmatprep.subr.mxu0 0.0
    %591 = vmatpush1.msra.mxu0 0.0
    %592 = vmatprep.subr.mxu0 0.0
    %593 = vmatpush1.msra.mxu0 0.0
    %594 = vmatprep.subr.mxu0 0.0
    %595 = vmatpush1.msra.mxu0 0.0
    %596 = vmatprep.subr.mxu0 0.0
    %597 = vmatpush1.msra.mxu0 0.0
    %598 = vmatprep.subr.mxu0 0.0
    %599 = vmatpush1.msra.mxu0 0.0
    %600 = vmatprep.subr.mxu0 0.0
    %601 = vmatpush1.msra.mxu0 0.0
    %602 = vmatprep.subr.mxu0 0.0
    %603 = vmatpush1.msra.mxu0 0.0
    %604 = vmatprep.subr.mxu0 0.0
    %605 = vmatpush1.msra.mxu0 0.0
    %606 = vmatprep.subr.mxu0 0.0
    %607 = vmatpush1.msra.mxu0 0.0
    %608 = vmatprep.subr.mxu0 0.0
    %609 = vmatpush1.msra.mxu0 0.0
    %610 = vmatprep.subr.mxu0 0.0
    %611 = vmatpush1.msra.mxu0 0.0
    %612 = vmatprep.subr.mxu0 0.0
    %613 = vmatpush1.msra.mxu0 0.0
    %614 = vmatprep.subr.mxu0 0.0
    %615 = vmatpush1.msra.mxu0 0.0
    %616 = vmatprep.subr.mxu0 0.0
    %617 = vmatpush1.msra.mxu0 0.0
    %618 = vmatprep.subr.mxu0 0.0
    %619 = vmatpush1.msra.mxu0 0.0
    %620 = vmatprep.subr.mxu0 0.0
    %621 = vmatpush1.msra.mxu0 0.0
    %622 = vmatprep.subr.mxu0 0.0
    %623 = vmatpush1.msra.mxu0 0.0
    %624 = vmatprep.subr.mxu0 0.0
    %625 = vmatpush1.msra.mxu0 0.0
    %626 = vmatprep.subr.mxu0 0.0
    %627 = vmatpush1.msra.mxu0 0.0
    %628 = vmatprep.subr.mxu0 0.0
    %629 = vmatpush1.msra.mxu0 0.0
    %630 = vmatprep.mubr.f32.mxu0 0.0
    %631 = vmatmul.mubr.f32.gmra.mrb[0].mxu0 %v564
    %v632 = vpop.f32.mrb[0].mxu0
    %v633 = vadd.f32 %v146, %v632
    %v634 = vpop.f32.mrb[0].mxu0
    %635 = vdwg.mxu0
    %v636 = vadd.f32 %v131, %v633
    %v637 = vxor.u32 %v636, 2147483648
    %v638 = vmul.f32 %v637, 1.442695
    %v639 = vpow.pop %v638
    %v640 = vadd.f32 %v639, 1.0
    %v641 = vrcp.pop %v640
    %v642 = vmul.f32 1.0, %v641
    %644 = vrot.lane.b32.xlu0 %v633, 64
    %v645 = vpop.permute.xlu0 %644
    %v647 = vmul.f32 %v642, %v645
    %649 = vrot.lane.b32.xlu0 %v647, 64
    %v650 = vpop.permute.xlu0 %649
    %v652 = vadd.f32 %v131, %v650
    %v653 = vtanh.pop %v652
    %v654 = vsub.f32 1.0, %v642
    %656 = vrot.lane.b32.xlu0 %v653, 96
    %v657 = vpop.permute.xlu0 %656
    %v659 = vmul.f32 %v654, %v657
    %v661 = vmul.f32 %v642, %v561
    %v662 = vadd.f32 %v659, %v661
    %664 = vrot.lane.b32.xlu0 %v662, 96
    %v665 = vpop.permute.xlu0 %664
    %v666 = vsel %vm147, %v665, 0
    %668 = vmatprep.subr.mxu0 0.0
    %669 = vmatpush1.msra.mxu0 %v139
    %670 = vmatprep.subr.mxu0 0.0
    %671 = vmatpush1.msra.mxu0 %v140
    %672 = vmatprep.subr.mxu0 0.0
    %673 = vmatpush1.msra.mxu0 %v141
    %674 = vmatprep.subr.mxu0 0.0
    %675 = vmatpush1.msra.mxu0 %v142
    %676 = vmatprep.subr.mxu0 0.0
    %677 = vmatpush1.msra.mxu0 0.0
    %678 = vmatprep.subr.mxu0 0.0
    %679 = vmatpush1.msra.mxu0 0.0
    %680 = vmatprep.subr.mxu0 0.0
    %681 = vmatpush1.msra.mxu0 0.0
    %682 = vmatprep.subr.mxu0 0.0
    %683 = vmatpush1.msra.mxu0 0.0
    %684 = vmatprep.subr.mxu0 0.0
    %685 = vmatpush1.msra.mxu0 0.0
    %686 = vmatprep.subr.mxu0 0.0
    %687 = vmatpush1.msra.mxu0 0.0
    %688 = vmatprep.subr.mxu0 0.0
    %689 = vmatpush1.msra.mxu0 0.0
    %690 = vmatprep.subr.mxu0 0.0
    %691 = vmatpush1.msra.mxu0 0.0
    %692 = vmatprep.subr.mxu0 0.0
    %693 = vmatpush1.msra.mxu0 0.0
    %694 = vmatprep.subr.mxu0 0.0
    %695 = vmatpush1.msra.mxu0 0.0
    %696 = vmatprep.subr.mxu0 0.0
    %697 = vmatpush1.msra.mxu0 0.0
    %698 = vmatprep.subr.mxu0 0.0
    %699 = vmatpush1.msra.mxu0 0.0
    %700 = vmatprep.subr.mxu0 0.0
    %701 = vmatpush1.msra.mxu0 0.0
    %702 = vmatprep.subr.mxu0 0.0
    %703 = vmatpush1.msra.mxu0 0.0
    %704 = vmatprep.subr.mxu0 0.0
    %705 = vmatpush1.msra.mxu0 0.0
    %706 = vmatprep.subr.mxu0 0.0
    %707 = vmatpush1.msra.mxu0 0.0
    %708 = vmatprep.subr.mxu0 0.0
    %709 = vmatpush1.msra.mxu0 0.0
    %710 = vmatprep.subr.mxu0 0.0
    %711 = vmatpush1.msra.mxu0 0.0
    %712 = vmatprep.subr.mxu0 0.0
    %713 = vmatpush1.msra.mxu0 0.0
    %714 = vmatprep.subr.mxu0 0.0
    %715 = vmatpush1.msra.mxu0 0.0
    %716 = vmatprep.subr.mxu0 0.0
    %717 = vmatpush1.msra.mxu0 0.0
    %718 = vmatprep.subr.mxu0 0.0
    %719 = vmatpush1.msra.mxu0 0.0
    %720 = vmatprep.subr.mxu0 0.0
    %721 = vmatpush1.msra.mxu0 0.0
    %722 = vmatprep.subr.mxu0 0.0
    %723 = vmatpush1.msra.mxu0 0.0
    %724 = vmatprep.subr.mxu0 0.0
    %725 = vmatpush1.msra.mxu0 0.0
    %726 = vmatprep.subr.mxu0 0.0
    %727 = vmatpush1.msra.mxu0 0.0
    %728 = vmatprep.subr.mxu0 0.0
    %729 = vmatpush1.msra.mxu0 0.0
    %730 = vmatprep.subr.mxu0 0.0
    %731 = vmatpush1.msra.mxu0 0.0
    %732 = vmatprep.mubr.f32.mxu0 0.0
    %733 = vmatmul.mubr.f32.gmra.mrb[0].mxu0 %v666
    %v734 = vpop.f32.mrb[0].mxu0
    %v735 = vadd.f32 %v146, %v734
    %v736 = vpop.f32.mrb[0].mxu0
    %737 = vdwg.mxu0
    %v739 = vrot.slane %v735, 4
    %v741 = vadd.f32 %v131, %v739
    %v742 = vxor.u32 %v741, 2147483648
    %v743 = vmul.f32 %v742, 1.442695
    %v744 = vpow.pop %v743
    %v745 = vadd.f32 %v744, 1.0
    %v746 = vrcp.pop %v745
    %v747 = vmul.f32 1.0, %v746
    %748 = vrot.lane.b32.xlu0 %v739, 64
    %v749 = vpop.permute.xlu0 %748
    %v751 = vmul.f32 %v747, %v749
    %753 = vrot.lane.b32.xlu0 %v751, 64
    %v754 = vpop.permute.xlu0 %753
    %v756 = vadd.f32 %v131, %v754
    %v757 = vtanh.pop %v756
    %v758 = vsub.f32 1.0, %v747
    %760 = vrot.lane.b32.xlu0 %v757, 96
    %v761 = vpop.permute.xlu0 %760
    %v763 = vmul.f32 %v758, %v761
    %v764 = vrot.slane %v662, 4
    %v766 = vmul.f32 %v747, %v764
    %v767 = vadd.f32 %v763, %v766
    %v769 = vrot.slane %v767, 4
    %770 = vrot.lane.b32.xlu0 %v769, 96
    %v771 = vpop.permute.xlu0 %770
    %v772 = vsel %vm147, %v771, 0
    %774 = vmatprep.subr.mxu0 0.0
    %775 = vmatpush1.msra.mxu0 %v139
    %776 = vmatprep.subr.mxu0 0.0
    %777 = vmatpush1.msra.mxu0 %v140
    %778 = vmatprep.subr.mxu0 0.0
    %779 = vmatpush1.msra.mxu0 %v141
    %780 = vmatprep.subr.mxu0 0.0
    %781 = vmatpush1.msra.mxu0 %v142
    %782 = vmatprep.subr.mxu0 0.0
    %783 = vmatpush1.msra.mxu0 0.0
    %784 = vmatprep.subr.mxu0 0.0
    %785 = vmatpush1.msra.mxu0 0.0
    %786 = vmatprep.subr.mxu0 0.0
    %787 = vmatpush1.msra.mxu0 0.0
    %788 = vmatprep.subr.mxu0 0.0
    %789 = vmatpush1.msra.mxu0 0.0
    %790 = vmatprep.subr.mxu0 0.0
    %791 = vmatpush1.msra.mxu0 0.0
    %792 = vmatprep.subr.mxu0 0.0
    %793 = vmatpush1.msra.mxu0 0.0
    %794 = vmatprep.subr.mxu0 0.0
    %795 = vmatpush1.msra.mxu0 0.0
    %796 = vmatprep.subr.mxu0 0.0
    %797 = vmatpush1.msra.mxu0 0.0
    %798 = vmatprep.subr.mxu0 0.0
    %799 = vmatpush1.msra.mxu0 0.0
    %800 = vmatprep.subr.mxu0 0.0
    %801 = vmatpush1.msra.mxu0 0.0
    %802 = vmatprep.subr.mxu0 0.0
    %803 = vmatpush1.msra.mxu0 0.0
    %804 = vmatprep.subr.mxu0 0.0
    %805 = vmatpush1.msra.mxu0 0.0
    %806 = vmatprep.subr.mxu0 0.0
    %807 = vmatpush1.msra.mxu0 0.0
    %808 = vmatprep.subr.mxu0 0.0
    %809 = vmatpush1.msra.mxu0 0.0
    %810 = vmatprep.subr.mxu0 0.0
    %811 = vmatpush1.msra.mxu0 0.0
    %812 = vmatprep.subr.mxu0 0.0
    %813 = vmatpush1.msra.mxu0 0.0
    %814 = vmatprep.subr.mxu0 0.0
    %815 = vmatpush1.msra.mxu0 0.0
    %816 = vmatprep.subr.mxu0 0.0
    %817 = vmatpush1.msra.mxu0 0.0
    %818 = vmatprep.subr.mxu0 0.0
    %819 = vmatpush1.msra.mxu0 0.0
    %820 = vmatprep.subr.mxu0 0.0
    %821 = vmatpush1.msra.mxu0 0.0
    %822 = vmatprep.subr.mxu0 0.0
    %823 = vmatpush1.msra.mxu0 0.0
    %824 = vmatprep.subr.mxu0 0.0
    %825 = vmatpush1.msra.mxu0 0.0
    %826 = vmatprep.subr.mxu0 0.0
    %827 = vmatpush1.msra.mxu0 0.0
    %828 = vmatprep.subr.mxu0 0.0
    %829 = vmatpush1.msra.mxu0 0.0
    %830 = vmatprep.subr.mxu0 0.0
    %831 = vmatpush1.msra.mxu0 0.0
    %832 = vmatprep.subr.mxu0 0.0
    %833 = vmatpush1.msra.mxu0 0.0
    %834 = vmatprep.subr.mxu0 0.0
    %835 = vmatpush1.msra.mxu0 0.0
    %836 = vmatprep.subr.mxu0 0.0
    %837 = vmatpush1.msra.mxu0 0.0
    %838 = vmatprep.mubr.f32.mxu0 0.0
    %839 = vmatmul.mubr.f32.gmra.mrb[0].mxu0 %v772
    %v840 = vpop.f32.mrb[0].mxu0
    %v841 = vadd.f32 %v146, %v840
    %v842 = vpop.f32.mrb[0].mxu0
    %843 = vdwg.mxu0
    %v844 = vadd.f32 %v136, %v841
    %v845 = vxor.u32 %v844, 2147483648
    %v846 = vmul.f32 %v845, 1.442695
    %v847 = vpow.pop %v846
    %v848 = vadd.f32 %v847, 1.0
    %v849 = vrcp.pop %v848
    %v850 = vmul.f32 1.0, %v849
    %852 = vrot.lane.b32.xlu0 %v841, 64
    %v853 = vpop.permute.xlu0 %852
    %v855 = vmul.f32 %v850, %v853
    %857 = vrot.lane.b32.xlu0 %v855, 64
    %v858 = vpop.permute.xlu0 %857
    %v860 = vadd.f32 %v136, %v858
    %v861 = vtanh.pop %v860
    %v862 = vsub.f32 1.0, %v850
    %864 = vrot.lane.b32.xlu0 %v861, 96
    %v865 = vpop.permute.xlu0 %864
    %v867 = vmul.f32 %v862, %v865
    %v869 = vmul.f32 %v850, %v769
    %v870 = vadd.f32 %v867, %v869
    %872 = vrot.lane.b32.xlu0 %v870, 96
    %v873 = vpop.permute.xlu0 %872
    %v874 = vsel %vm147, %v873, 0
    %876 = vmatprep.subr.mxu0 0.0
    %877 = vmatpush1.msra.mxu0 %v139
    %878 = vmatprep.subr.mxu0 0.0
    %879 = vmatpush1.msra.mxu0 %v140
    %880 = vmatprep.subr.mxu0 0.0
    %881 = vmatpush1.msra.mxu0 %v141
    %882 = vmatprep.subr.mxu0 0.0
    %883 = vmatpush1.msra.mxu0 %v142
    %884 = vmatprep.subr.mxu0 0.0
    %885 = vmatpush1.msra.mxu0 0.0
    %886 = vmatprep.subr.mxu0 0.0
    %887 = vmatpush1.msra.mxu0 0.0
    %888 = vmatprep.subr.mxu0 0.0
    %889 = vmatpush1.msra.mxu0 0.0
    %890 = vmatprep.subr.mxu0 0.0
    %891 = vmatpush1.msra.mxu0 0.0
    %892 = vmatprep.subr.mxu0 0.0
    %893 = vmatpush1.msra.mxu0 0.0
    %894 = vmatprep.subr.mxu0 0.0
    %895 = vmatpush1.msra.mxu0 0.0
    %896 = vmatprep.subr.mxu0 0.0
    %897 = vmatpush1.msra.mxu0 0.0
    %898 = vmatprep.subr.mxu0 0.0
    %899 = vmatpush1.msra.mxu0 0.0
    %900 = vmatprep.subr.mxu0 0.0
    %901 = vmatpush1.msra.mxu0 0.0
    %902 = vmatprep.subr.mxu0 0.0
    %903 = vmatpush1.msra.mxu0 0.0
    %904 = vmatprep.subr.mxu0 0.0
    %905 = vmatpush1.msra.mxu0 0.0
    %906 = vmatprep.subr.mxu0 0.0
    %907 = vmatpush1.msra.mxu0 0.0
    %908 = vmatprep.subr.mxu0 0.0
    %909 = vmatpush1.msra.mxu0 0.0
    %910 = vmatprep.subr.mxu0 0.0
    %911 = vmatpush1.msra.mxu0 0.0
    %912 = vmatprep.subr.mxu0 0.0
    %913 = vmatpush1.msra.mxu0 0.0
    %914 = vmatprep.subr.mxu0 0.0
    %915 = vmatpush1.msra.mxu0 0.0
    %916 = vmatprep.subr.mxu0 0.0
    %917 = vmatpush1.msra.mxu0 0.0
    %918 = vmatprep.subr.mxu0 0.0
    %919 = vmatpush1.msra.mxu0 0.0
    %920 = vmatprep.subr.mxu0 0.0
    %921 = vmatpush1.msra.mxu0 0.0
    %922 = vmatprep.subr.mxu0 0.0
    %923 = vmatpush1.msra.mxu0 0.0
    %924 = vmatprep.subr.mxu0 0.0
    %925 = vmatpush1.msra.mxu0 0.0
    %926 = vmatprep.subr.mxu0 0.0
    %927 = vmatpush1.msra.mxu0 0.0
    %928 = vmatprep.subr.mxu0 0.0
    %929 = vmatpush1.msra.mxu0 0.0
    %930 = vmatprep.subr.mxu0 0.0
    %931 = vmatpush1.msra.mxu0 0.0
    %932 = vmatprep.subr.mxu0 0.0
    %933 = vmatpush1.msra.mxu0 0.0
    %934 = vmatprep.subr.mxu0 0.0
    %935 = vmatpush1.msra.mxu0 0.0
    %936 = vmatprep.subr.mxu0 0.0
    %937 = vmatpush1.msra.mxu0 0.0
    %938 = vmatprep.subr.mxu0 0.0
    %939 = vmatpush1.msra.mxu0 0.0
    %940 = vmatprep.mubr.f32.mxu0 0.0
    %941 = vmatmul.mubr.f32.gmra.mrb[0].mxu0 %v874
    %v942 = vpop.f32.mrb[0].mxu0
    %v943 = vadd.f32 %v146, %v942
    %v944 = vpop.f32.mrb[0].mxu0
    %945 = vdwg.mxu0
    %v947 = vrot.slane %v943, 4
    %v949 = vadd.f32 %v136, %v947
    %v950 = vxor.u32 %v949, 2147483648
    %v951 = vmul.f32 %v950, 1.442695
    %v952 = vpow.pop %v951
    %v953 = vadd.f32 %v952, 1.0
    %v954 = vrcp.pop %v953
    %v955 = vmul.f32 1.0, %v954
    %956 = vrot.lane.b32.xlu0 %v947, 64
    %v957 = vpop.permute.xlu0 %956
    %v959 = vmul.f32 %v955, %v957
    %961 = vrot.lane.b32.xlu0 %v959, 64
    %v962 = vpop.permute.xlu0 %961
    %v964 = vadd.f32 %v136, %v962
    %v965 = vtanh.pop %v964
    %v966 = vsub.f32 1.0, %v955
    %968 = vrot.lane.b32.xlu0 %v965, 96
    %v969 = vpop.permute.xlu0 %968
    %v971 = vmul.f32 %v966, %v969
    %v972 = vrot.slane %v870, 4
    %v974 = vmul.f32 %v955, %v972
    %v975 = vadd.f32 %v971, %v974
    %v976 = vld [vmem:[%s0 + $0x1c] sm:$0xf]
    %s977 = scalar_lea.vmem %s1, 16
    %v978 = vld [vmem:[%s977] sm:$0xff]
    %v979 = vld [vmem:[%s977 + $0x8] sm:$0xff]
    %v980 = vlaneseq
    %v981 = vshrl.u32 %v980, 7
    %v982 = vsub.s32 2, %v981
    %v983 = vrot.slane %v30, %v982
    %v985 = vsel %vm41, %v976, 0
    %987 = vmatprep.subr.mxu0 0.0
    %988 = vmatpush1.msra.mxu0 %v978
    %989 = vmatprep.subr.mxu0 0.0
    %990 = vmatpush1.msra.mxu0 %v979
    %991 = vmatprep.subr.mxu0 0.0
    %992 = vmatpush1.msra.mxu0 0.0
    %993 = vmatprep.subr.mxu0 0.0
    %994 = vmatpush1.msra.mxu0 0.0
    %995 = vmatprep.subr.mxu0 0.0
    %996 = vmatpush1.msra.mxu0 0.0
    %997 = vmatprep.subr.mxu0 0.0
    %998 = vmatpush1.msra.mxu0 0.0
    %999 = vmatprep.subr.mxu0 0.0
    %1000 = vmatpush1.msra.mxu0 0.0
    %1001 = vmatprep.subr.mxu0 0.0
    %1002 = vmatpush1.msra.mxu0 0.0
    %1003 = vmatprep.subr.mxu0 0.0
    %1004 = vmatpush1.msra.mxu0 0.0
    %1005 = vmatprep.subr.mxu0 0.0
    %1006 = vmatpush1.msra.mxu0 0.0
    %1007 = vmatprep.subr.mxu0 0.0
    %1008 = vmatpush1.msra.mxu0 0.0
    %1009 = vmatprep.subr.mxu0 0.0
    %1010 = vmatpush1.msra.mxu0 0.0
    %1011 = vmatprep.subr.mxu0 0.0
    %1012 = vmatpush1.msra.mxu0 0.0
    %1013 = vmatprep.subr.mxu0 0.0
    %1014 = vmatpush1.msra.mxu0 0.0
    %1015 = vmatprep.subr.mxu0 0.0
    %1016 = vmatpush1.msra.mxu0 0.0
    %1017 = vmatprep.subr.mxu0 0.0
    %1018 = vmatpush1.msra.mxu0 0.0
    %1019 = vmatprep.subr.mxu0 0.0
    %1020 = vmatpush1.msra.mxu0 0.0
    %1021 = vmatprep.subr.mxu0 0.0
    %1022 = vmatpush1.msra.mxu0 0.0
    %1023 = vmatprep.subr.mxu0 0.0
    %1024 = vmatpush1.msra.mxu0 0.0
    %1025 = vmatprep.subr.mxu0 0.0
    %1026 = vmatpush1.msra.mxu0 0.0
    %1027 = vmatprep.subr.mxu0 0.0
    %1028 = vmatpush1.msra.mxu0 0.0
    %1029 = vmatprep.subr.mxu0 0.0
    %1030 = vmatpush1.msra.mxu0 0.0
    %1031 = vmatprep.subr.mxu0 0.0
    %1032 = vmatpush1.msra.mxu0 0.0
    %1033 = vmatprep.subr.mxu0 0.0
    %1034 = vmatpush1.msra.mxu0 0.0
    %1035 = vmatprep.subr.mxu0 0.0
    %1036 = vmatpush1.msra.mxu0 0.0
    %1037 = vmatprep.subr.mxu0 0.0
    %1038 = vmatpush1.msra.mxu0 0.0
    %1039 = vmatprep.subr.mxu0 0.0
    %1040 = vmatpush1.msra.mxu0 0.0
    %1041 = vmatprep.subr.mxu0 0.0
    %1042 = vmatpush1.msra.mxu0 0.0
    %1043 = vmatprep.subr.mxu0 0.0
    %1044 = vmatpush1.msra.mxu0 0.0
    %1045 = vmatprep.subr.mxu0 0.0
    %1046 = vmatpush1.msra.mxu0 0.0
    %1047 = vmatprep.subr.mxu0 0.0
    %1048 = vmatpush1.msra.mxu0 0.0
    %1049 = vmatprep.subr.mxu0 0.0
    %1050 = vmatpush1.msra.mxu0 0.0
    %1051 = vmatprep.mubr.f32.mxu0 0.0
    %1052 = vmatmul.mubr.f32.gmra.mrb[0].mxu0 %v985
    %v1053 = vpop.f32.mrb[0].mxu0
    %v1054 = vadd.f32 %v983, %v1053
    %v1055 = vpop.f32.mrb[0].mxu0
    %1056 = vdwg.mxu0
    %v1057 = vlaneseq
    %v1058 = vshrl.u32 %v1057, 7
    %v1059 = vsub.s32 3, %v1058
    %v1060 = vrot.slane %v30, %v1059
    %v1061 = vadd.f32 %v1054, %v1060
    %v1062 = vxor.u32 %v1061, 2147483648
    %v1063 = vmul.f32 %v1062, 1.442695
    %v1064 = vpow.pop %v1063
    %v1065 = vadd.f32 %v1064, 1.0
    %v1066 = vrcp.pop %v1065
    %v1067 = vmul.f32 1.0, %v1066
    %1069 = vrot.lane.b32.xlu0 %v1060, 64
    %v1070 = vpop.permute.xlu0 %1069
    %v1072 = vmul.f32 %v1067, %v1070
    %1074 = vrot.lane.b32.xlu0 %v1072, 64
    %v1075 = vpop.permute.xlu0 %1074
    %v1077 = vadd.f32 %v1054, %v1075
    %v1078 = vtanh.pop %v1077
    %v1079 = vsub.f32 1.0, %v1067
    %1081 = vrot.lane.b32.xlu0 %v1078, 96
    %v1082 = vpop.permute.xlu0 %1081
    %v1084 = vmul.f32 %v1079, %v1082
    %v1085 = vmul.f32 %v1067, 0.0
    %v1086 = vadd.f32 %v1084, %v1085
    %1088 = vrot.lane.b32.xlu0 %v975, 96
    %v1089 = vpop.permute.xlu0 %1088
    %v1092 = vrot.slane %v1086, 4
    %v1094 = vsel %vm147, %v1089, %v1092
    %v1095 = vld [vmem:[%s4] sm:$0xf]
    %s1096 = scalar_lea.vmem %s4, 4
    %v1097 = vld [vmem:[%s1096] sm:$0xf]
    %v1099 = vrot.slane %v1094, 4
    %1100 = vrot.lane.b32.xlu0 %v1099, 127
    %v1101 = vpop.permute.xlu0 %1100
    %vm1102 = vcmask 31744
    %v1104 = vsel %vm1102, %v1097, 0
    %vm1106 = vcmask 1043456
    %v1107 = vsel %vm1106, %v1101, 0
    %1109 = vmatprep.subr.mxu0 0.0
    %1110 = vmatpush1.msra.mxu0 %v1107
    %1111 = vmatprep.subr.mxu0 0.0
    %1112 = vmatpush1.msra.mxu0 0.0
    %1113 = vmatprep.subr.mxu0 0.0
    %1114 = vmatpush1.msra.mxu0 0.0
    %1115 = vmatprep.subr.mxu0 0.0
    %1116 = vmatpush1.msra.mxu0 0.0
    %1117 = vmatprep.subr.mxu0 0.0
    %1118 = vmatpush1.msra.mxu0 0.0
    %1119 = vmatprep.subr.mxu0 0.0
    %1120 = vmatpush1.msra.mxu0 0.0
    %1121 = vmatprep.subr.mxu0 0.0
    %1122 = vmatpush1.msra.mxu0 0.0
    %1123 = vmatprep.subr.mxu0 0.0
    %1124 = vmatpush1.msra.mxu0 0.0
    %1125 = vmatprep.subr.mxu0 0.0
    %1126 = vmatpush1.msra.mxu0 0.0
    %1127 = vmatprep.subr.mxu0 0.0
    %1128 = vmatpush1.msra.mxu0 0.0
    %1129 = vmatprep.subr.mxu0 0.0
    %1130 = vmatpush1.msra.mxu0 0.0
    %1131 = vmatprep.subr.mxu0 0.0
    %1132 = vmatpush1.msra.mxu0 0.0
    %1133 = vmatprep.subr.mxu0 0.0
    %1134 = vmatpush1.msra.mxu0 0.0
    %1135 = vmatprep.subr.mxu0 0.0
    %1136 = vmatpush1.msra.mxu0 0.0
    %1137 = vmatprep.subr.mxu0 0.0
    %1138 = vmatpush1.msra.mxu0 0.0
    %1139 = vmatprep.subr.mxu0 0.0
    %1140 = vmatpush1.msra.mxu0 0.0
    %1141 = vmatprep.subr.mxu0 0.0
    %1142 = vmatpush1.msra.mxu0 0.0
    %1143 = vmatprep.subr.mxu0 0.0
    %1144 = vmatpush1.msra.mxu0 0.0
    %1145 = vmatprep.subr.mxu0 0.0
    %1146 = vmatpush1.msra.mxu0 0.0
    %1147 = vmatprep.subr.mxu0 0.0
    %1148 = vmatpush1.msra.mxu0 0.0
    %1149 = vmatprep.subr.mxu0 0.0
    %1150 = vmatpush1.msra.mxu0 0.0
    %1151 = vmatprep.subr.mxu0 0.0
    %1152 = vmatpush1.msra.mxu0 0.0
    %1153 = vmatprep.subr.mxu0 0.0
    %1154 = vmatpush1.msra.mxu0 0.0
    %1155 = vmatprep.subr.mxu0 0.0
    %1156 = vmatpush1.msra.mxu0 0.0
    %1157 = vmatprep.subr.mxu0 0.0
    %1158 = vmatpush1.msra.mxu0 0.0
    %1159 = vmatprep.subr.mxu0 0.0
    %1160 = vmatpush1.msra.mxu0 0.0
    %1161 = vmatprep.subr.mxu0 0.0
    %1162 = vmatpush1.msra.mxu0 0.0
    %1163 = vmatprep.subr.mxu0 0.0
    %1164 = vmatpush1.msra.mxu0 0.0
    %1165 = vmatprep.subr.mxu0 0.0
    %1166 = vmatpush1.msra.mxu0 0.0
    %1167 = vmatprep.subr.mxu0 0.0
    %1168 = vmatpush1.msra.mxu0 0.0
    %1169 = vmatprep.subr.mxu0 0.0
    %1170 = vmatpush1.msra.mxu0 0.0
    %1171 = vmatprep.subr.mxu0 0.0
    %1172 = vmatpush1.msra.mxu0 0.0
    %1173 = vmatprep.mubr.f32.mxu0 0.0
    %1174 = vmatmul.mubr.f32.gmra.mrb[0].mxu0 %v1104
    %v1175 = vpop.f32.mrb[0].mxu0
    %v1176 = vadd.f32 0.0, %v1175
    %v1177 = vpop.f32.mrb[0].mxu0
    %1178 = vdwg.mxu0
    %v1180 = vsel %vm1102, %v1095, 0
    %v1182 = vsel %vm1106, %v1099, 0
    %1184 = vmatprep.subr.mxu0 0.0
    %1185 = vmatpush1.msra.mxu0 %v1182
    %1186 = vmatprep.subr.mxu0 0.0
    %1187 = vmatpush1.msra.mxu0 0.0
    %1188 = vmatprep.subr.mxu0 0.0
    %1189 = vmatpush1.msra.mxu0 0.0
    %1190 = vmatprep.subr.mxu0 0.0
    %1191 = vmatpush1.msra.mxu0 0.0
    %1192 = vmatprep.subr.mxu0 0.0
    %1193 = vmatpush1.msra.mxu0 0.0
    %1194 = vmatprep.subr.mxu0 0.0
    %1195 = vmatpush1.msra.mxu0 0.0
    %1196 = vmatprep.subr.mxu0 0.0
    %1197 = vmatpush1.msra.mxu0 0.0
    %1198 = vmatprep.subr.mxu0 0.0
    %1199 = vmatpush1.msra.mxu0 0.0
    %1200 = vmatprep.subr.mxu0 0.0
    %1201 = vmatpush1.msra.mxu0 0.0
    %1202 = vmatprep.subr.mxu0 0.0
    %1203 = vmatpush1.msra.mxu0 0.0
    %1204 = vmatprep.subr.mxu0 0.0
    %1205 = vmatpush1.msra.mxu0 0.0
    %1206 = vmatprep.subr.mxu0 0.0
    %1207 = vmatpush1.msra.mxu0 0.0
    %1208 = vmatprep.subr.mxu0 0.0
    %1209 = vmatpush1.msra.mxu0 0.0
    %1210 = vmatprep.subr.mxu0 0.0
    %1211 = vmatpush1.msra.mxu0 0.0
    %1212 = vmatprep.subr.mxu0 0.0
    %1213 = vmatpush1.msra.mxu0 0.0
    %1214 = vmatprep.subr.mxu0 0.0
    %1215 = vmatpush1.msra.mxu0 0.0
    %1216 = vmatprep.subr.mxu0 0.0
    %1217 = vmatpush1.msra.mxu0 0.0
    %1218 = vmatprep.subr.mxu0 0.0
    %1219 = vmatpush1.msra.mxu0 0.0
    %1220 = vmatprep.subr.mxu0 0.0
    %1221 = vmatpush1.msra.mxu0 0.0
    %1222 = vmatprep.subr.mxu0 0.0
    %1223 = vmatpush1.msra.mxu0 0.0
    %1224 = vmatprep.subr.mxu0 0.0
    %1225 = vmatpush1.msra.mxu0 0.0
    %1226 = vmatprep.subr.mxu0 0.0
    %1227 = vmatpush1.msra.mxu0 0.0
    %1228 = vmatprep.subr.mxu0 0.0
    %1229 = vmatpush1.msra.mxu0 0.0
    %1230 = vmatprep.subr.mxu0 0.0
    %1231 = vmatpush1.msra.mxu0 0.0
    %1232 = vmatprep.subr.mxu0 0.0
    %1233 = vmatpush1.msra.mxu0 0.0
    %1234 = vmatprep.subr.mxu0 0.0
    %1235 = vmatpush1.msra.mxu0 0.0
    %1236 = vmatprep.subr.mxu0 0.0
    %1237 = vmatpush1.msra.mxu0 0.0
    %1238 = vmatprep.subr.mxu0 0.0
    %1239 = vmatpush1.msra.mxu0 0.0
    %1240 = vmatprep.subr.mxu0 0.0
    %1241 = vmatpush1.msra.mxu0 0.0
    %1242 = vmatprep.subr.mxu0 0.0
    %1243 = vmatpush1.msra.mxu0 0.0
    %1244 = vmatprep.subr.mxu0 0.0
    %1245 = vmatpush1.msra.mxu0 0.0
    %1246 = vmatprep.subr.mxu0 0.0
    %1247 = vmatpush1.msra.mxu0 0.0
    %1248 = vmatprep.mubr.f32.mxu0 0.0
    %1249 = vmatmul.mubr.f32.gmra.mrb[0].mxu0 %v1180
    %v1250 = vpop.f32.mrb[0].mxu0
    %v1251 = vadd.f32 %v1176, %v1250
    %v1252 = vpop.f32.mrb[0].mxu0
    %1253 = vdwg.mxu0
    %s1254 = scalar_lea.vmem %s4, 8
    %v1255 = vld [vmem:[%s1254] sm:$0xf]
    %1256 = vrot.lane.b32.xlu0 %v1099, 126
    %v1257 = vpop.permute.xlu0 %1256
    %v1259 = vsel %vm1102, %v1255, 0
    %v1261 = vsel %vm1106, %v1257, 0
    %1263 = vmatprep.subr.mxu0 0.0
    %1264 = vmatpush1.msra.mxu0 %v1261
    %1265 = vmatprep.subr.mxu0 0.0
    %1266 = vmatpush1.msra.mxu0 0.0
    %1267 = vmatprep.subr.mxu0 0.0
    %1268 = vmatpush1.msra.mxu0 0.0
    %1269 = vmatprep.subr.mxu0 0.0
    %1270 = vmatpush1.msra.mxu0 0.0
    %1271 = vmatprep.subr.mxu0 0.0
    %1272 = vmatpush1.msra.mxu0 0.0
    %1273 = vmatprep.subr.mxu0 0.0
    %1274 = vmatpush1.msra.mxu0 0.0
    %1275 = vmatprep.subr.mxu0 0.0
    %1276 = vmatpush1.msra.mxu0 0.0
    %1277 = vmatprep.subr.mxu0 0.0
    %1278 = vmatpush1.msra.mxu0 0.0
    %1279 = vmatprep.subr.mxu0 0.0
    %1280 = vmatpush1.msra.mxu0 0.0
    %1281 = vmatprep.subr.mxu0 0.0
    %1282 = vmatpush1.msra.mxu0 0.0
    %1283 = vmatprep.subr.mxu0 0.0
    %1284 = vmatpush1.msra.mxu0 0.0
    %1285 = vmatprep.subr.mxu0 0.0
    %1286 = vmatpush1.msra.mxu0 0.0
    %1287 = vmatprep.subr.mxu0 0.0
    %1288 = vmatpush1.msra.mxu0 0.0
    %1289 = vmatprep.subr.mxu0 0.0
    %1290 = vmatpush1.msra.mxu0 0.0
    %1291 = vmatprep.subr.mxu0 0.0
    %1292 = vmatpush1.msra.mxu0 0.0
    %1293 = vmatprep.subr.mxu0 0.0
    %1294 = vmatpush1.msra.mxu0 0.0
    %1295 = vmatprep.subr.mxu0 0.0
    %1296 = vmatpush1.msra.mxu0 0.0
    %1297 = vmatprep.subr.mxu0 0.0
    %1298 = vmatpush1.msra.mxu0 0.0
    %1299 = vmatprep.subr.mxu0 0.0
    %1300 = vmatpush1.msra.mxu0 0.0
    %1301 = vmatprep.subr.mxu0 0.0
    %1302 = vmatpush1.msra.mxu0 0.0
    %1303 = vmatprep.subr.mxu0 0.0
    %1304 = vmatpush1.msra.mxu0 0.0
    %1305 = vmatprep.subr.mxu0 0.0
    %1306 = vmatpush1.msra.mxu0 0.0
    %1307 = vmatprep.subr.mxu0 0.0
    %1308 = vmatpush1.msra.mxu0 0.0
    %1309 = vmatprep.subr.mxu0 0.0
    %1310 = vmatpush1.msra.mxu0 0.0
    %1311 = vmatprep.subr.mxu0 0.0
    %1312 = vmatpush1.msra.mxu0 0.0
    %1313 = vmatprep.subr.mxu0 0.0
    %1314 = vmatpush1.msra.mxu0 0.0
    %1315 = vmatprep.subr.mxu0 0.0
    %1316 = vmatpush1.msra.mxu0 0.0
    %1317 = vmatprep.subr.mxu0 0.0
    %1318 = vmatpush1.msra.mxu0 0.0
    %1319 = vmatprep.subr.mxu0 0.0
    %1320 = vmatpush1.msra.mxu0 0.0
    %1321 = vmatprep.subr.mxu0 0.0
    %1322 = vmatpush1.msra.mxu0 0.0
    %1323 = vmatprep.subr.mxu0 0.0
    %1324 = vmatpush1.msra.mxu0 0.0
    %1325 = vmatprep.subr.mxu0 0.0
    %1326 = vmatpush1.msra.mxu0 0.0
    %1327 = vmatprep.mubr.f32.mxu0 0.0
    %1328 = vmatmul.mubr.f32.gmra.mrb[0].mxu0 %v1259
    %v1329 = vpop.f32.mrb[0].mxu0
    %v1330 = vadd.f32 0.0, %v1329
    %v1331 = vpop.f32.mrb[0].mxu0
    %1332 = vdwg.mxu0
    %v1333 = vadd.f32 %v1251, %v1330
    %s1334 = scalar_lea.vmem %s4, 12
    %v1335 = vld [vmem:[%s1334] sm:$0xf]
    %1336 = vrot.lane.b32.xlu0 %v1099, 125
    %v1337 = vpop.permute.xlu0 %1336
    %v1339 = vsel %vm1102, %v1335, 0
    %v1341 = vsel %vm1106, %v1337, 0
    %1343 = vmatprep.subr.mxu0 0.0
    %1344 = vmatpush1.msra.mxu0 %v1341
    %1345 = vmatprep.subr.mxu0 0.0
    %1346 = vmatpush1.msra.mxu0 0.0
    %1347 = vmatprep.subr.mxu0 0.0
    %1348 = vmatpush1.msra.mxu0 0.0
    %1349 = vmatprep.subr.mxu0 0.0
    %1350 = vmatpush1.msra.mxu0 0.0
    %1351 = vmatprep.subr.mxu0 0.0
    %1352 = vmatpush1.msra.mxu0 0.0
    %1353 = vmatprep.subr.mxu0 0.0
    %1354 = vmatpush1.msra.mxu0 0.0
    %1355 = vmatprep.subr.mxu0 0.0
    %1356 = vmatpush1.msra.mxu0 0.0
    %1357 = vmatprep.subr.mxu0 0.0
    %1358 = vmatpush1.msra.mxu0 0.0
    %1359 = vmatprep.subr.mxu0 0.0
    %1360 = vmatpush1.msra.mxu0 0.0
    %1361 = vmatprep.subr.mxu0 0.0
    %1362 = vmatpush1.msra.mxu0 0.0
    %1363 = vmatprep.subr.mxu0 0.0
    %1364 = vmatpush1.msra.mxu0 0.0
    %1365 = vmatprep.subr.mxu0 0.0
    %1366 = vmatpush1.msra.mxu0 0.0
    %1367 = vmatprep.subr.mxu0 0.0
    %1368 = vmatpush1.msra.mxu0 0.0
    %1369 = vmatprep.subr.mxu0 0.0
    %1370 = vmatpush1.msra.mxu0 0.0
    %1371 = vmatprep.subr.mxu0 0.0
    %1372 = vmatpush1.msra.mxu0 0.0
    %1373 = vmatprep.subr.mxu0 0.0
    %1374 = vmatpush1.msra.mxu0 0.0
    %1375 = vmatprep.subr.mxu0 0.0
    %1376 = vmatpush1.msra.mxu0 0.0
    %1377 = vmatprep.subr.mxu0 0.0
    %1378 = vmatpush1.msra.mxu0 0.0
    %1379 = vmatprep.subr.mxu0 0.0
    %1380 = vmatpush1.msra.mxu0 0.0
    %1381 = vmatprep.subr.mxu0 0.0
    %1382 = vmatpush1.msra.mxu0 0.0
    %1383 = vmatprep.subr.mxu0 0.0
    %1384 = vmatpush1.msra.mxu0 0.0
    %1385 = vmatprep.subr.mxu0 0.0
    %1386 = vmatpush1.msra.mxu0 0.0
    %1387 = vmatprep.subr.mxu0 0.0
    %1388 = vmatpush1.msra.mxu0 0.0
    %1389 = vmatprep.subr.mxu0 0.0
    %1390 = vmatpush1.msra.mxu0 0.0
    %1391 = vmatprep.subr.mxu0 0.0
    %1392 = vmatpush1.msra.mxu0 0.0
    %1393 = vmatprep.subr.mxu0 0.0
    %1394 = vmatpush1.msra.mxu0 0.0
    %1395 = vmatprep.subr.mxu0 0.0
    %1396 = vmatpush1.msra.mxu0 0.0
    %1397 = vmatprep.subr.mxu0 0.0
    %1398 = vmatpush1.msra.mxu0 0.0
    %1399 = vmatprep.subr.mxu0 0.0
    %1400 = vmatpush1.msra.mxu0 0.0
    %1401 = vmatprep.subr.mxu0 0.0
    %1402 = vmatpush1.msra.mxu0 0.0
    %1403 = vmatprep.subr.mxu0 0.0
    %1404 = vmatpush1.msra.mxu0 0.0
    %1405 = vmatprep.subr.mxu0 0.0
    %1406 = vmatpush1.msra.mxu0 0.0
    %1407 = vmatprep.mubr.f32.mxu0 0.0
    %1408 = vmatmul.mubr.f32.gmra.mrb[0].mxu0 %v1339
    %v1409 = vpop.f32.mrb[0].mxu0
    %v1410 = vadd.f32 0.0, %v1409
    %v1411 = vpop.f32.mrb[0].mxu0
    %1412 = vdwg.mxu0
    %v1413 = vadd.f32 %v1333, %v1410
    %v1414 = vld [vmem:[%s5] sm:$0xf]
    %1416 = vset.pattern.permute.xlu0 0
    %1417 = vperm.xlu0 %1416, %v1414
    %v1418 = vpop.permute.xlu0 %1417
    %v1420 = vadd.f32 %v1413, %v1418
    %v1421 = vld [vmem:[%s6] sm:$0xff]
    %v1422 = vld [vmem:[%s6 + $0x8] sm:$0xff]
    %v1423 = vld [vmem:[%s6 + $0x10] sm:$0xff]
    %v1424 = vld [vmem:[%s6 + $0x18] sm:$0xff]
    %v1425 = vld [vmem:[%s6 + $0x20] sm:$0xff]
    %v1426 = vld [vmem:[%s6 + $0x28] sm:$0xff]
    %v1427 = vld [vmem:[%s6 + $0x30] sm:$0xff]
    %v1428 = vld [vmem:[%s6 + $0x38] sm:$0x1f]
    %v1429 = vld [vmem:[%s7] sm:$0x1]
    %v1431 = vlaneseq
    %v1432 = vshrl.u32 %v1431, 7
    %v1433 = vsub.s32 0, %v1432
    %v1434 = vrot.slane %v1429, %v1433
    %vm1436 = vcmask 498688
    %v1438 = vsel %vm1436, %v1420, 0
    %vm1440 = vcmask 1044480
    %v1442 = vsel %vm1440, %v1428, 0
    %1444 = vmatprep.subr.mxu0 0.0
    %1445 = vmatpush1.msra.mxu0 %v1421
    %1446 = vmatprep.subr.mxu0 0.0
    %1447 = vmatpush1.msra.mxu0 %v1422
    %1448 = vmatprep.subr.mxu0 0.0
    %1449 = vmatpush1.msra.mxu0 %v1423
    %1450 = vmatprep.subr.mxu0 0.0
    %1451 = vmatpush1.msra.mxu0 %v1424
    %1452 = vmatprep.subr.mxu0 0.0
    %1453 = vmatpush1.msra.mxu0 %v1425
    %1454 = vmatprep.subr.mxu0 0.0
    %1455 = vmatpush1.msra.mxu0 %v1426
    %1456 = vmatprep.subr.mxu0 0.0
    %1457 = vmatpush1.msra.mxu0 %v1427
    %1458 = vmatprep.subr.mxu0 0.0
    %1459 = vmatpush1.msra.mxu0 %v1442
    %1460 = vmatprep.subr.mxu0 0.0
    %1461 = vmatpush1.msra.mxu0 0.0
    %1462 = vmatprep.subr.mxu0 0.0
    %1463 = vmatpush1.msra.mxu0 0.0
    %1464 = vmatprep.subr.mxu0 0.0
    %1465 = vmatpush1.msra.mxu0 0.0
    %1466 = vmatprep.subr.mxu0 0.0
    %1467 = vmatpush1.msra.mxu0 0.0
    %1468 = vmatprep.subr.mxu0 0.0
    %1469 = vmatpush1.msra.mxu0 0.0
    %1470 = vmatprep.subr.mxu0 0.0
    %1471 = vmatpush1.msra.mxu0 0.0
    %1472 = vmatprep.subr.mxu0 0.0
    %1473 = vmatpush1.msra.mxu0 0.0
    %1474 = vmatprep.subr.mxu0 0.0
    %1475 = vmatpush1.msra.mxu0 0.0
    %1476 = vmatprep.subr.mxu0 0.0
    %1477 = vmatpush1.msra.mxu0 0.0
    %1478 = vmatprep.subr.mxu0 0.0
    %1479 = vmatpush1.msra.mxu0 0.0
    %1480 = vmatprep.subr.mxu0 0.0
    %1481 = vmatpush1.msra.mxu0 0.0
    %1482 = vmatprep.subr.mxu0 0.0
    %1483 = vmatpush1.msra.mxu0 0.0
    %1484 = vmatprep.subr.mxu0 0.0
    %1485 = vmatpush1.msra.mxu0 0.0
    %1486 = vmatprep.subr.mxu0 0.0
    %1487 = vmatpush1.msra.mxu0 0.0
    %1488 = vmatprep.subr.mxu0 0.0
    %1489 = vmatpush1.msra.mxu0 0.0
    %1490 = vmatprep.subr.mxu0 0.0
    %1491 = vmatpush1.msra.mxu0 0.0
    %1492 = vmatprep.subr.mxu0 0.0
    %1493 = vmatpush1.msra.mxu0 0.0
    %1494 = vmatprep.subr.mxu0 0.0
    %1495 = vmatpush1.msra.mxu0 0.0
    %1496 = vmatprep.subr.mxu0 0.0
    %1497 = vmatpush1.msra.mxu0 0.0
    %1498 = vmatprep.subr.mxu0 0.0
    %1499 = vmatpush1.msra.mxu0 0.0
    %1500 = vmatprep.subr.mxu0 0.0
    %1501 = vmatpush1.msra.mxu0 0.0
    %1502 = vmatprep.subr.mxu0 0.0
    %1503 = vmatpush1.msra.mxu0 0.0
    %1504 = vmatprep.subr.mxu0 0.0
    %1505 = vmatpush1.msra.mxu0 0.0
    %1506 = vmatprep.subr.mxu0 0.0
    %1507 = vmatpush1.msra.mxu0 0.0
    %1508 = vmatprep.mubr.f32.mxu0 0.0
    %1509 = vmatmul.mubr.f32.gmra.mrb[0].mxu0 %v1438
    %v1510 = vpop.f32.mrb[0].mxu0
    %v1511 = vadd.f32 %v1434, %v1510
    %v1512 = vpop.f32.mrb[0].mxu0
    %1513 = vdwg.mxu0
    %vm1514 = vcmask 35840
    %1515 = vst.msk [vmem:[#allocation2] sm:$0xf] %vm1514, %v1511
    // Predicated region
    $region34: #{tpu_custom_call.1} parent=1 // pred_check
      _
    $region35: #{tpu_custom_call.1} parent=1 // pred_check_branch
      %1517 = sbr.rel (0) target = $region37
    $region36: #{tpu_custom_call.1} parent=1 // pred_region
      %s1519 = ssub.s32 64, 64
      %1520 = vsyncadd [#allocation3], %s1519
      %s1522 = sshll.u32 [#allocation2], 4
      %s1523 = int_to_ptr.vmem [resolvable:$true] %s1522
      %1525 = dma.vmem_to_hbm [thread:$0]  %s1523, 64, %s8, [#allocation3]
    $region37: #{tpu_custom_call.1} parent=1 // pred_fallthru
      _
    // Predicated region
    $region38: #{tpu_custom_call.1} parent=1 // pred_check
      _
    $region39: #{tpu_custom_call.1} parent=1 // pred_check_branch
      %1527 = sbr.rel (0) target = $region41
    $region40: #{tpu_custom_call.1} parent=1 // pred_region
      %1528 = dma.done [#allocation3], 64
    $region41: #{tpu_custom_call.1} parent=1 // pred_fallthru
      _
    %1529 = vsyncpa [#allocation3], 1

</llo_original>
